<compile_context>
chip_gen: v5e
topology: v5e:2x2
jax: 0.10.0
libtpu: 0.0.40
codegen_flags: <defaults>
</compile_context>

<pallas_src>
import functools
import numpy as np
import jax
import jax.numpy as jnp
from jax.experimental import pallas as pl
from jax.experimental.pallas import tpu as pltpu

F32 = jnp.float32
BF16 = jnp.bfloat16
BN_EPS = 1e-5
VMEM_LIMIT_BYTES = 32 * 1024 * 1024   # safe on v5e/v6e/v7x; >> largest working set


def _round_up(x, m):
    return (x + m - 1) // m * m


def _pick_tk(Kp):
    """K tile: whole K when small, else prefer 256-aligned tiles (v6e/v7x MXU)."""
    if Kp <= 2048:
        return Kp
    for cand in (2048, 1536, 1024, 768, 512, 256):
        if Kp % cand == 0:
            return cand
    for cand in (1920, 1664, 1408, 1152, 896, 640, 384, 128):
        if Kp % cand == 0:
            return cand
    return 128


def _pick_tn(Np):
    """N tile: whole N when small, else prefer 256-aligned tiles."""
    if Np <= 512:
        return Np
    for cand in (512, 256):
        if Np % cand == 0:
            return cand
    for cand in (384, 128):
        if Np % cand == 0:
            return cand
    return 128


# ---------------------------------------------------------------------------
# Pallas kernels
# ---------------------------------------------------------------------------
def _matmul_affine_kernel(relu, has_res, dual):
    """acc = sum_k A_bf16 @ B_bf16 (f32 acc).
    Epilogue (last K step): affine (scale/shift) [+ residual] [+ ReLU].
    `dual=True` additionally emits the plain (pre-residual) result as a second
    output (used by CRP intermediate stages)."""
    if dual:
        def kernel(a_ref, b_ref, s_ref, t_ref, r_ref, o1_ref, o2_ref, acc_ref):
            @pl.when(pl.program_id(2) == 0)
            def _():
                acc_ref[...] = jnp.zeros_like(acc_ref)

            acc_ref[...] += jnp.dot(a_ref[...], b_ref[...],
                                    preferred_element_type=jnp.float32)

            @pl.when(pl.program_id(2) == pl.num_programs(2) - 1)
            def _():
                plain = acc_ref[...] * s_ref[...] + t_ref[...]
                fused = plain + r_ref[...].astype(jnp.float32)
                if relu:
                    plain = jnp.maximum(plain, 0.0)
                    fused = jnp.maximum(fused, 0.0)
                o1_ref[...] = plain.astype(o1_ref.dtype)
                o2_ref[...] = fused.astype(o2_ref.dtype)
        return kernel

    if has_res:
        def kernel(a_ref, b_ref, s_ref, t_ref, r_ref, o_ref, acc_ref):
            @pl.when(pl.program_id(2) == 0)
            def _():
                acc_ref[...] = jnp.zeros_like(acc_ref)

            acc_ref[...] += jnp.dot(a_ref[...], b_ref[...],
                                    preferred_element_type=jnp.float32)

            @pl.when(pl.program_id(2) == pl.num_programs(2) - 1)
            def _():
                r = acc_ref[...] * s_ref[...] + t_ref[...] + \
                    r_ref[...].astype(jnp.float32)
                if relu:
                    r = jnp.maximum(r, 0.0)
                o_ref[...] = r.astype(o_ref.dtype)
        return kernel

    def kernel(a_ref, b_ref, s_ref, t_ref, o_ref, acc_ref):
        @pl.when(pl.program_id(2) == 0)
        def _():
            acc_ref[...] = jnp.zeros_like(acc_ref)

        acc_ref[...] += jnp.dot(a_ref[...], b_ref[...],
                                preferred_element_type=jnp.float32)

        @pl.when(pl.program_id(2) == pl.num_programs(2) - 1)
        def _():
            r = acc_ref[...] * s_ref[...] + t_ref[...]
            if relu:
                r = jnp.maximum(r, 0.0)
            o_ref[...] = r.astype(o_ref.dtype)
    return kernel


def matmul_affine(a, b_p, s_p, t_p, n_out, *, relu=False, residual=None,
                  dual=False):
    """out = [relu]((a @ b_p) * s_p + t_p [+ residual]); bf16 output.

    b_p is pre-transposed/pre-padded bf16 (Kp, Np); s_p/t_p are padded (1, Np)
    f32 rows; a is (M, K) bf16 and is padded only when needed.  With dual=True
    (requires residual) returns (plain, plain + residual)."""
    assert (not dual) or (residual is not None)
    M, K = a.shape
    Kp, Np = b_p.shape

    if M >= 1024:
        tm = 512                        # halve weight re-streaming across M
    else:
        tm = min(_round_up(M, 8), 256)  # keep parallel grid >= 2 where possible
    Mp = _round_up(M, tm)
    tk = _pick_tk(Kp)
    tn = _pick_tn(Np)

    a = a.astype(BF16)
    if (Mp, Kp) != (M, K):
        a = jnp.pad(a, ((0, Mp - M), (0, Kp - K)))

    has_res = residual is not None
    in_specs = [
        pl.BlockSpec((tm, tk), lambda i, j, k: (i, k)),
        pl.BlockSpec((tk, tn), lambda i, j, k: (k, j)),
        pl.BlockSpec((1, tn), lambda i, j, k: (0, j)),
        pl.BlockSpec((1, tn), lambda i, j, k: (0, j)),
    ]
    args = [a, b_p, s_p, t_p]
    if has_res:
        r = residual.astype(BF16)
        if r.shape != (Mp, Np):
            r = jnp.pad(r, ((0, Mp - r.shape[0]), (0, Np - r.shape[1])))
        in_specs.append(pl.BlockSpec((tm, tn), lambda i, j, k: (i, j)))
        args.append(r)

    one_out = jax.ShapeDtypeStruct((Mp, Np), BF16)
    if dual:
        out_shape = (one_out, jax.ShapeDtypeStruct((Mp, Np), BF16))
        out_specs = (pl.BlockSpec((tm, tn), lambda i, j, k: (i, j)),
                     pl.BlockSpec((tm, tn), lambda i, j, k: (i, j)))
    else:
        out_shape = one_out
        out_specs = pl.BlockSpec((tm, tn), lambda i, j, k: (i, j))

    out = pl.pallas_call(
        _matmul_affine_kernel(relu, has_res, dual),
        out_shape=out_shape,
        grid_spec=pltpu.PrefetchScalarGridSpec(
            num_scalar_prefetch=0,
            grid=(Mp // tm, Np // tn, Kp // tk),
            in_specs=in_specs,
            out_specs=out_specs,
            scratch_shapes=[pltpu.VMEM((tm, tn), jnp.float32)],
        ),
        compiler_params=pltpu.CompilerParams(
            dimension_semantics=("parallel", "parallel", "arbitrary"),
            vmem_limit_bytes=VMEM_LIMIT_BYTES),
    )(*args)

    if dual:
        o1, o2 = out
        if Mp != M or Np != n_out:
            o1 = o1[:M, :n_out]
            o2 = o2[:M, :n_out]
        return o1, o2
    if Mp != M or Np != n_out:
        out = out[:M, :n_out]
    return out


def _maxpool_kernel(x_ref, o_ref, *, k):
    """Separable k x k stride-1 window max over a padded NHWC block.
    TODO(synk): use pltpu.roll for the (sublane) W shifts + H halo tiling."""
    Ho = o_ref.shape[1]
    Wo = o_ref.shape[2]
    r = x_ref[:, :, 0:Wo, :]
    for dw in range(1, k):
        r = jnp.maximum(r, x_ref[:, :, dw:dw + Wo, :])
    out = r[:, 0:Ho]
    for dh in range(1, k):
        out = jnp.maximum(out, r[:, dh:dh + Ho])
    o_ref[...] = out


@functools.partial(jax.jit, static_argnames=("k", "stride", "padding"))
def maxpool2d(x, *, k, stride, padding):
    """NHWC max pooling (PyTorch semantics), bf16 in/out. Window max computed
    in-kernel; stride>1 is a subsample of the stride-1 result (stem only)."""
    N, H, W, C = x.shape
    if padding:
        xp = jnp.pad(x, ((0, 0), (padding, padding), (padding, padding), (0, 0)),
                     constant_values=-jnp.inf)
    else:
        xp = x
    Hp, Wp = H + 2 * padding, W + 2 * padding
    Hs, Ws = Hp - k + 1, Wp - k + 1       # stride-1 output extents
    tc = C if C <= 256 else 256
    assert C % tc == 0
    out = pl.pallas_call(
        functools.partial(_maxpool_kernel, k=k),
        out_shape=jax.ShapeDtypeStruct((N, Hs, Ws, C), x.dtype),
        grid=(C // tc,),
        in_specs=[pl.BlockSpec((N, Hp, Wp, tc), lambda c: (0, 0, 0, c))],
        out_specs=pl.BlockSpec((N, Hs, Ws, tc), lambda c: (0, 0, 0, c)),
        compiler_params=pltpu.CompilerParams(
            dimension_semantics=("parallel",)),
    )(xp)
    if stride > 1:
        Ho = (H + 2 * padding - k) // stride + 1
        Wo = (W + 2 * padding - k) // stride + 1
        out = out[:, ::stride, ::stride, :][:, :Ho, :Wo, :]
    return out


# ---------------------------------------------------------------------------
# Convolution (im2col glue in JAX on bf16, matmul + epilogue in Pallas)
# ---------------------------------------------------------------------------
@functools.partial(jax.jit,
                   static_argnames=("kh", "kw", "cout", "stride", "padding",
                                    "relu", "dual"))
def _conv2d_impl(x, w_mat, scale_p, shift_p, residual, *,
                 kh, kw, cout, stride, padding, relu, dual):
    N, H, W, C = x.shape
    Ho = (H + 2 * padding - kh) // stride + 1
    Wo = (W + 2 * padding - kw) // stride + 1
    xb = x.astype(BF16)
    if padding:
        xb = jnp.pad(xb, ((0, 0), (padding, padding), (padding, padding), (0, 0)))
    if kh == 1 and kw == 1:
        if stride > 1:
            xb = xb[:, ::stride, ::stride, :]
        patches = xb.reshape(N * Ho * Wo, C)
    else:
        # TODO(synk): in-kernel im2col (manual-DMA shifted A operand) to avoid
        # this kh*kw activation expansion through HBM.
        cols = []
        for dh in range(kh):
            for dw in range(kw):
                cols.append(xb[:, dh:dh + stride * Ho:stride,
                               dw:dw + stride * Wo:stride, :])
        patches = jnp.stack(cols, axis=3).reshape(N * Ho * Wo, kh * kw * C)
    res2 = None if residual is None else residual.reshape(N * Ho * Wo, cout)
    out = matmul_affine(patches, w_mat, scale_p, shift_p, cout,
                        relu=relu, residual=res2, dual=dual)
    if dual:
        return (out[0].reshape(N, Ho, Wo, cout),
                out[1].reshape(N, Ho, Wo, cout))
    return out.reshape(N, Ho, Wo, cout)


def conv2d(x, cp, bn=None, *, stride=1, padding=0, relu=False, residual=None,
           dual=False):
    """x: NHWC bf16; cp: packed conv params; bn: optional folded BatchNorm.
    dual=True (with residual) returns (conv_out, conv_out + residual)."""
    scale_p = bn['scale_p'] if bn is not None else cp['scale_p']
    shift_p = bn['shift_p'] if bn is not None else cp['shift_p']
    return _conv2d_impl(x, cp['w_mat'], scale_p, shift_p, residual,
                        kh=cp['kh'], kw=cp['kw'], cout=cp['cout'],
                        stride=stride, padding=padding, relu=relu, dual=dual)


def conv_transpose2d(x, tp, *, stride, padding, out_hw):
    """PyTorch ConvTranspose2d(k=3, stride=2, padding=1) with explicit output
    size (fancy_upsample), phase-decomposed into a single matmul over 2x2
    input patches: ~2.25x fewer MACs than the zero-dilated dense conv, no
    scatter, one pallas_call."""
    assert stride == 2 and padding == 1 and tp['kh'] == 3 and tp['kw'] == 3
    N, H, W, C = x.shape
    Ho, Wo = out_hw
    assert 2 * H - 1 <= Ho <= 2 * H and 2 * W - 1 <= Wo <= 2 * W
    cout = tp['cout']
    xp = jnp.pad(x.astype(BF16), ((0, 0), (0, 1), (0, 1), (0, 0)))
    cols = [xp[:, di:di + H, dj:dj + W, :] for di in (0, 1) for dj in (0, 1)]
    patches = jnp.stack(cols, axis=3).reshape(N * H * W, 4 * C)
    out = matmul_affine(patches, tp['w_mat'], tp['scale_p'], tp['shift_p'],
                        4 * cout)
    out = out.reshape(N, H, W, 2, 2, cout)                 # (.., ph, pw, c)
    out = jnp.transpose(out, (0, 1, 3, 2, 4, 5)).reshape(N, 2 * H, 2 * W, cout)
    return out[:, :Ho, :Wo, :]


# ---------------------------------------------------------------------------
# Deterministic parameter construction (weights stored matmul-ready)
# ---------------------------------------------------------------------------
class ParamGen:
    def __init__(self, key):
        self.key = key
        self.i = 0

    def _next(self):
        self.i += 1
        return jax.random.fold_in(self.key, self.i)

    def _pack_conv(self, w_oihw, bias, cout, kh, kw):
        cin = w_oihw.shape[1]
        K = kh * kw * cin
        Kp = _round_up(K, 128)
        Np = _round_up(cout, 128)
        w_mat = jnp.transpose(w_oihw, (2, 3, 1, 0)).reshape(K, cout)
        w_mat = jnp.pad(w_mat, ((0, Kp - K), (0, Np - cout))).astype(BF16)
        scale_p = jnp.pad(jnp.ones((1, cout), F32), ((0, 0), (0, Np - cout)))
        shift_p = jnp.pad(bias.reshape(1, cout), ((0, 0), (0, Np - cout)))
        return {'w_mat': w_mat, 'scale_p': scale_p, 'shift_p': shift_p,
                'kh': kh, 'kw': kw, 'cout': cout}

    def conv(self, cin, cout, k, bias=False):
        w = jax.random.normal(self._next(), (cout, cin, k, k), F32)
        w = w * (1.0 / np.sqrt(cin * k * k))
        b = (0.01 * jax.random.normal(self._next(), (cout,), F32)
             if bias else jnp.zeros((cout,), F32))
        return self._pack_conv(w, b, cout, k, k)

    def convT(self, cin, cout, k):
        """ConvTranspose2d(k=3, s=2, p=1) packed as a phase-decomposed matrix:
        rows = 2x2 input taps (di,dj) x cin, cols = output phases (ph,pw) x cout."""
        assert k == 3
        w = jax.random.normal(self._next(), (cin, cout, k, k), F32)
        w = w * (1.0 / np.sqrt(cin * k * k))
        b = 0.01 * jax.random.normal(self._next(), (cout,), F32)

        def kidx(ph, d):
            # kernel index along one axis contributing to output phase `ph`
            # (0=even,1=odd) from input tap offset `d` in {0,1}; None => zero.
            if ph == 0:
                return 1 if d == 0 else None
            return 2 - 2 * d

        K, Nc = 4 * cin, 4 * cout
        w_mat = jnp.zeros((K, Nc), F32)
        for di in (0, 1):
            for dj in (0, 1):
                t = di * 2 + dj
                for ph in (0, 1):
                    for pw in (0, 1):
                        khi, kwi = kidx(ph, di), kidx(pw, dj)
                        if khi is None or kwi is None:
                            continue
                        g = ph * 2 + pw
                        w_mat = w_mat.at[t * cin:(t + 1) * cin,
                                         g * cout:(g + 1) * cout].set(
                                             w[:, :, khi, kwi])
        Kp = _round_up(K, 128)
        Np = _round_up(Nc, 128)
        w_mat = jnp.pad(w_mat, ((0, Kp - K), (0, Np - Nc))).astype(BF16)
        scale_p = jnp.pad(jnp.ones((1, Nc), F32), ((0, 0), (0, Np - Nc)))
        shift_p = jnp.pad(jnp.tile(b.reshape(1, cout), (1, 4)),
                          ((0, 0), (0, Np - Nc)))
        return {'w_mat': w_mat, 'scale_p': scale_p, 'shift_p': shift_p,
                'kh': k, 'kw': k, 'cout': cout}

    def bn(self, c):
        gamma = 1.0 + 0.1 * jax.random.normal(self._next(), (c,), F32)
        beta = 0.1 * jax.random.normal(self._next(), (c,), F32)
        mean = 0.1 * jax.random.normal(self._next(), (c,), F32)
        var = 1.0 + 0.1 * jnp.abs(jax.random.normal(self._next(), (c,), F32))
        scale = gamma / jnp.sqrt(var + BN_EPS)
        shift = beta - mean * scale
        Cp = _round_up(c, 128)
        return {'scale_p': jnp.pad(scale.reshape(1, c), ((0, 0), (0, Cp - c))),
                'shift_p': jnp.pad(shift.reshape(1, c), ((0, 0), (0, Cp - c)))}


# ---------------------------------------------------------------------------
# Blocks
# ---------------------------------------------------------------------------
def make_basicblock(pg, inplanes, planes, stride=1, downsample=False):
    p = {'conv1': pg.conv(inplanes, planes, 3), 'bn1': pg.bn(planes),
         'conv2': pg.conv(planes, planes, 3), 'bn2': pg.bn(planes),
         'stride': stride}
    if downsample:
        p['ds_conv'] = pg.conv(inplanes, planes, 1)
        p['ds_bn'] = pg.bn(planes)
    return p


def basicblock_fwd(x, p):
    out = conv2d(x, p['conv1'], p['bn1'], stride=p['stride'], padding=1, relu=True)
    if 'ds_conv' in p:
        residual = conv2d(x, p['ds_conv'], p['ds_bn'], stride=p['stride'])
    else:
        residual = x
    # conv2 + bn2 + residual add + ReLU fused in one Pallas epilogue.
    return conv2d(out, p['conv2'], p['bn2'], stride=1, padding=1,
                  relu=True, residual=residual)


def make_bottleneck(pg, inplanes, planes, stride=1, downsample=False):
    p = {'conv1': pg.conv(inplanes, planes, 1), 'bn1': pg.bn(planes),
         'conv2': pg.conv(planes, planes, 3), 'bn2': pg.bn(planes),
         'conv3': pg.conv(planes, planes * 4, 1), 'bn3': pg.bn(planes * 4),
         'stride': stride}
    if downsample:
        p['ds_conv'] = pg.conv(inplanes, planes * 4, 1)
        p['ds_bn'] = pg.bn(planes * 4)
    return p


def bottleneck_fwd(x, p):
    # TODO(synk): fuse whole block into one pallas_call for the tiny-spatial
    # layer3/layer4 stages (weights resident in VMEM, no HBM round trips).
    out = conv2d(x, p['conv1'], p['bn1'], relu=True)
    out = conv2d(out, p['conv2'], p['bn2'], stride=p['stride'], padding=1, relu=True)
    if 'ds_conv' in p:
        residual = conv2d(x, p['ds_conv'], p['ds_bn'], stride=p['stride'])
    else:
        residual = x
    # conv3 + bn3 + residual add + ReLU fused.
    return conv2d(out, p['conv3'], p['bn3'], relu=True, residual=residual)


def make_crp(pg, in_planes, out_planes, n_stages):
    return {'convs': [pg.conv(in_planes if i == 0 else out_planes, out_planes, 3)
                      for i in range(n_stages)]}


def crp_fwd(x, p):
    top = x
    n = len(p['convs'])
    for i, conv in enumerate(p['convs']):
        top = maxpool2d(top, k=5, stride=1, padding=2)
        if i == n - 1:
            # last stage: only the accumulated sum is needed -> single fused out.
            x = conv2d(top, conv, stride=1, padding=1, residual=x)
        else:
            # dual epilogue: (conv result, conv result + running sum) in one
            # kernel -> no separate elementwise add / extra HBM round trip.
            top, x = conv2d(top, conv, stride=1, padding=1, residual=x, dual=True)
    return x


def make_mmfnet(pg, c):
    return {'conv1_rgb': pg.conv(c, c, 1),
            'rcus_rgb': [make_basicblock(pg, c, c) for _ in range(2)],
            'conv3_rgb': pg.conv(c, c, 3),
            'conv1_hha': pg.conv(c, c, 1),
            'rcus_hha': [make_basicblock(pg, c, c) for _ in range(2)],
            'conv3_hha': pg.conv(c, c, 3),
            'crp': make_crp(pg, c, c, 1)}


def mmfnet_fwd(x_rgb, x_depth, p):
    # Dropout(p=0.5): identity in inference mode.
    r = conv2d(x_rgb, p['conv1_rgb'])
    for bp in p['rcus_rgb']:
        r = basicblock_fwd(r, bp)
    r = conv2d(r, p['conv3_rgb'], stride=1, padding=1)
    d = conv2d(x_depth, p['conv1_hha'])
    for bp in p['rcus_hha']:
        d = basicblock_fwd(d, bp)
    # x = relu(conv3_hha(d) + r) fused into the conv epilogue.
    x = conv2d(d, p['conv3_hha'], stride=1, padding=1, residual=r, relu=True)
    return crp_fwd(x, p['crp'])


def make_refinenet(pg, inplanes_lr, inplanes_hr=None, fancy_upsample=False):
    p = {'fancy': fancy_upsample, 'has_hr': inplanes_hr is not None}
    if inplanes_hr is None:
        p['rcu1'] = [make_basicblock(pg, inplanes_lr, inplanes_lr),
                     make_basicblock(pg, inplanes_lr, inplanes_lr)]
        out = inplanes_lr
    else:
        p['rcu1'] = [make_basicblock(pg, inplanes_hr, inplanes_hr),
                     make_basicblock(pg, inplanes_hr, inplanes_hr)]
        p['adapt'] = pg.conv(inplanes_hr, inplanes_hr, 3)
        p['mflow_dimred'] = pg.conv(inplanes_lr, inplanes_hr, 3)
        if fancy_upsample:
            p['upsample'] = pg.convT(inplanes_hr, inplanes_hr, 3)
        out = inplanes_hr
    p['crp'] = make_crp(pg, out, out, 4)
    p['rcu2'] = [make_basicblock(pg, out, out)]
    return p


def refinenet_fwd(p, x_lr, x_hr=None):
    if x_hr is None:
        for bp in p['rcu1']:
            x_lr = basicblock_fwd(x_lr, bp)
        x = x_lr
    else:
        for bp in p['rcu1']:
            x_hr = basicblock_fwd(x_hr, bp)
        x_lr = conv2d(x_lr, p['mflow_dimred'], stride=1, padding=1)
        if p['fancy']:
            x_lr = conv_transpose2d(x_lr, p['upsample'], stride=2, padding=1,
                                    out_hw=(x_hr.shape[1], x_hr.shape[2]))
        else:
            # TODO(synk): bilinear (align_corners=True) upsample path is never
            # taken by the instantiated RefineNets (all use fancy_upsample=True).
            raise NotImplementedError
        # x = relu(adapt(x_hr) + x_lr) fused into the conv epilogue.
        x = conv2d(x_hr, p['adapt'], stride=1, padding=1, residual=x_lr, relu=True)
    x = crp_fwd(x, p['crp'])
    for bp in p['rcu2']:
        x = basicblock_fwd(x, bp)
    return x


# ---------------------------------------------------------------------------
# Full ResNet (RGB-D RefineNet head)
# ---------------------------------------------------------------------------
def make_layer(pg, inplanes, planes, blocks, stride=1):
    expansion = 4  # Bottleneck
    downsample = (stride != 1 or inplanes != planes * expansion)
    layer = [make_bottleneck(pg, inplanes, planes, stride, downsample)]
    inplanes = planes * expansion
    for _ in range(1, blocks):
        layer.append(make_bottleneck(pg, inplanes, planes))
    return layer, inplanes


def make_resnet(pg, layers, num_classes=40):
    p = {}
    p['conv1'] = pg.conv(3, 64, 7)
    p['conv1_depth'] = pg.conv(3, 64, 7)
    p['bn1'] = pg.bn(64)
    p['bn1_depth'] = pg.bn(64)
    inplanes = 64
    p['layer1'], inplanes = make_layer(pg, inplanes, 64, layers[0])
    p['layer2'], inplanes = make_layer(pg, inplanes, 128, layers[1], stride=2)
    p['layer3'], inplanes = make_layer(pg, inplanes, 256, layers[2], stride=2)
    p['layer4'], inplanes = make_layer(pg, inplanes, 512, layers[3], stride=2)
    # layer1_depth..layer4_depth exist in __init__ but are unused by forward.
    p['dimred_l1'] = pg.conv(2048, 512, 1)
    p['dimred_l2'] = pg.conv(1024, 256, 1)
    p['dimred_l3'] = pg.conv(512, 256, 1)
    p['dimred_l4'] = pg.conv(256, 256, 1)
    p['dimred_l1_d'] = pg.conv(2048, 512, 1)
    p['dimred_l2_d'] = pg.conv(1024, 256, 1)
    p['dimred_l3_d'] = pg.conv(512, 256, 1)
    p['dimred_l4_d'] = pg.conv(256, 256, 1)
    p['mmf_l4'] = make_mmfnet(pg, 512)
    p['mmf_l3'] = make_mmfnet(pg, 256)
    p['mmf_l2'] = make_mmfnet(pg, 256)
    p['mmf_l1'] = make_mmfnet(pg, 256)
    p['ref_l4'] = make_refinenet(pg, 512)
    p['ref_l4_l3'] = make_refinenet(pg, 512, 256, fancy_upsample=True)
    p['ref_l3_l2'] = make_refinenet(pg, 256, 256, fancy_upsample=True)
    p['ref_l2_l1'] = make_refinenet(pg, 256, 256, fancy_upsample=True)
    p['clf_conv'] = pg.conv(256, num_classes, 3, bias=True)
    return p


def resnet_forward(p, x, x_depth):
    """x, x_depth: NCHW float32 (PyTorch convention). Returns NCHW f32 logits."""
    x = jnp.transpose(x, (0, 2, 3, 1)).astype(BF16)
    x_depth = jnp.transpose(x_depth, (0, 2, 3, 1)).astype(BF16)
    n = x.shape[0]

    x = conv2d(x, p['conv1'], p['bn1'], stride=2, padding=3, relu=True)
    x_depth = conv2d(x_depth, p['conv1_depth'], p['bn1_depth'],
                     stride=2, padding=3, relu=True)

    # The original forward reuses layer1..layer4 (same weights) for the depth
    # stream -> batch-concatenate RGB + depth through the shared backbone.
    xx = jnp.concatenate([x, x_depth], axis=0)
    xx = maxpool2d(xx, k=3, stride=2, padding=1)

    def run_layer(inp, layer):
        for bp in layer:
            inp = bottleneck_fwd(inp, bp)
        return inp

    l1 = run_layer(xx, p['layer1'])
    l2 = run_layer(l1, p['layer2'])
    l3 = run_layer(l2, p['layer3'])
    l4 = run_layer(l3, p['layer4'])
    l1, l1_d = l1[:n], l1[n:]
    l2, l2_d = l2[:n], l2[n:]
    l3, l3_d = l3[:n], l3[n:]
    l4, l4_d = l4[:n], l4[n:]

    # Dropout(p=0.5) on l3/l4 (both streams): identity in inference mode.
    x4 = conv2d(l4, p['dimred_l1'], relu=True)
    x3 = conv2d(l3, p['dimred_l2'], relu=True)
    x2 = conv2d(l2, p['dimred_l3'], relu=True)
    x1 = conv2d(l1, p['dimred_l4'], relu=True)
    x4_d = conv2d(l4_d, p['dimred_l1_d'], relu=True)
    x3_d = conv2d(l3_d, p['dimred_l2_d'], relu=True)
    x2_d = conv2d(l2_d, p['dimred_l3_d'], relu=True)
    x1_d = conv2d(l1_d, p['dimred_l4_d'], relu=True)

    x4 = mmfnet_fwd(x4, x4_d, p['mmf_l4'])
    x3 = mmfnet_fwd(x3, x3_d, p['mmf_l3'])
    x2 = mmfnet_fwd(x2, x2_d, p['mmf_l2'])
    x1 = mmfnet_fwd(x1, x1_d, p['mmf_l1'])

    x4 = refinenet_fwd(p['ref_l4'], x4)
    x3 = refinenet_fwd(p['ref_l4_l3'], x4, x3)
    x2 = refinenet_fwd(p['ref_l3_l2'], x3, x2)
    x1 = refinenet_fwd(p['ref_l2_l1'], x2, x1)

    out = conv2d(x1, p['clf_conv'], stride=1, padding=1)
    return jnp.transpose(out, (0, 3, 1, 2)).astype(F32)  # back to NCHW f32


if __name__ == "__main__":
    root = jax.random.PRNGKey(0)
    k_in1, k_in2, k_par = jax.random.split(root, 3)

    # Small deterministic example inputs (NCHW, as PyTorch).
    N, H, W = 1, 64, 64
    x = jax.random.normal(k_in1, (N, 3, H, W), F32)
    x_depth = jax.random.normal(k_in2, (N, 3, H, W), F32)

    params = make_resnet(ParamGen(k_par), layers=[1, 1, 1, 1], num_classes=40)

    out = resnet_forward(params, x, x_depth)
    out = jax.block_until_ready(out)
    assert out.shape == (N, 40, H // 4, W // 4), out.shape
    assert bool(jnp.all(jnp.isfinite(out)))
    print("KERNEL_OK")
</pallas_src>

<mosaic_0001>
module attributes {stable_mosaic.version = 11 : i64} {
  func.func @kernel(%arg0: i32, %arg1: i32, %arg2: i32, %arg3: memref<512x256xbf16, #tpu.memory_space<vmem>>, %arg4: memref<256x128xbf16, #tpu.memory_space<vmem>>, %arg5: memref<1x128xf32, #tpu.memory_space<vmem>>, %arg6: memref<1x128xf32, #tpu.memory_space<vmem>>, %arg7: memref<512x128xbf16, #tpu.memory_space<vmem>>, %arg8: memref<512x128xf32, #tpu.memory_space<vmem>>) attributes {dimension_semantics = [#tpu.dimension_semantics<parallel>, #tpu.dimension_semantics<parallel>, #tpu.dimension_semantics<arbitrary>], iteration_bounds = array<i64: 2, 1, 1>, scalar_prefetch = 0 : i64, scratch_operands = 1 : i64, tpu.core_type = #tpu.core_type<tc>, window_params = [{transform_indices = @transform_0, window_bounds = array<i64: 512, 256>}, {transform_indices = @transform_1, window_bounds = array<i64: 256, 128>}, {transform_indices = @transform_2, window_bounds = array<i64: 1, 128>}, {transform_indices = @transform_3, window_bounds = array<i64: 1, 128>}, {transform_indices = @transform_4, window_bounds = array<i64: 512, 128>}]} {
    %c0_i32 = arith.constant 0 : i32
    %0 = arith.cmpi eq, %arg2, %c0_i32 : i32
    %1 = arith.extui %0 : i1 to i32
    %c0_i32_0 = arith.constant 0 : i32
    %2 = arith.cmpi ne, %1, %c0_i32_0 : i32
    scf.if %2 {
      %cst_10 = arith.constant 0.000000e+00 : f32
      %12 = vector.broadcast %cst_10 : f32 to vector<512x128xf32>
      %c0_11 = arith.constant 0 : index
      %c0_12 = arith.constant 0 : index
      %13 = vector.load %arg8[%c0_11, %c0_12] : memref<512x128xf32, #tpu.memory_space<vmem>>, vector<512x128xf32>
      tpu.vector_store %arg8[%c0_11, %c0_12], %12 {strides = array<i32>} : memref<512x128xf32, #tpu.memory_space<vmem>>, vector<512x128xf32>,
    } else {
    }
    %c0 = arith.constant 0 : index
    %c0_1 = arith.constant 0 : index
    %3 = vector.load %arg8[%c0, %c0_1] : memref<512x128xf32, #tpu.memory_space<vmem>>, vector<512x128xf32>
    %c0_2 = arith.constant 0 : index
    %c0_3 = arith.constant 0 : index
    %4 = vector.load %arg3[%c0_2, %c0_3] : memref<512x256xbf16, #tpu.memory_space<vmem>>, vector<512x256xbf16>
    %c0_4 = arith.constant 0 : index
    %c0_5 = arith.constant 0 : index
    %5 = vector.load %arg4[%c0_4, %c0_5] : memref<256x128xbf16, #tpu.memory_space<vmem>>, vector<256x128xbf16>
    %cst = arith.constant dense<0.000000e+00> : vector<512x128xf32>
    %6 = tpu.matmul %4, %5, %cst {dimension_numbers = #tpu.dot_dimension_numbers<[1], [0], [0], [1], [0, 0, 1, 1], [], []>} : vector<512x256xbf16>, vector<256x128xbf16>, vector<512x128xf32> -> vector<512x128xf32>
    %7 = arith.addf %3, %6 : vector<512x128xf32>
    %c0_6 = arith.constant 0 : index
    %c0_7 = arith.constant 0 : index
    %8 = vector.load %arg8[%c0_6, %c0_7] : memref<512x128xf32, #tpu.memory_space<vmem>>, vector<512x128xf32>
    tpu.vector_store %arg8[%c0_6, %c0_7], %7 {strides = array<i32>} : memref<512x128xf32, #tpu.memory_space<vmem>>, vector<512x128xf32>,
    %c0_i32_8 = arith.constant 0 : i32
    %9 = arith.cmpi eq, %arg2, %c0_i32_8 : i32
    %10 = arith.extui %9 : i1 to i32
    %c0_i32_9 = arith.constant 0 : i32
    %11 = arith.cmpi ne, %10, %c0_i32_9 : i32
    scf.if %11 {
      %c0_10 = arith.constant 0 : index
      %c0_11 = arith.constant 0 : index
      %12 = vector.load %arg8[%c0_10, %c0_11] : memref<512x128xf32, #tpu.memory_space<vmem>>, vector<512x128xf32>
      %c0_12 = arith.constant 0 : index
      %c0_13 = arith.constant 0 : index
      %13 = vector.load %arg5[%c0_12, %c0_13] : memref<1x128xf32, #tpu.memory_space<vmem>>, vector<1x128xf32>
      %14 = vector.broadcast %13 : vector<1x128xf32> to vector<512x128xf32>
      %15 = arith.mulf %12, %14 : vector<512x128xf32>
      %c0_14 = arith.constant 0 : index
      %c0_15 = arith.constant 0 : index
      %16 = vector.load %arg6[%c0_14, %c0_15] : memref<1x128xf32, #tpu.memory_space<vmem>>, vector<1x128xf32>
      %17 = vector.broadcast %16 : vector<1x128xf32> to vector<512x128xf32>
      %18 = arith.addf %15, %17 : vector<512x128xf32>
      %cst_16 = arith.constant 0.000000e+00 : f32
      %19 = vector.broadcast %cst_16 : f32 to vector<512x128xf32>
      %20 = arith.maximumf %18, %19 : vector<512x128xf32>
      %21 = arith.truncf %20 : vector<512x128xf32> to vector<512x128xbf16>
      %c0_17 = arith.constant 0 : index
      %c0_18 = arith.constant 0 : index
      %22 = vector.load %arg7[%c0_17, %c0_18] : memref<512x128xbf16, #tpu.memory_space<vmem>>, vector<512x128xbf16>
      tpu.vector_store %arg7[%c0_17, %c0_18], %21 {strides = array<i32>} : memref<512x128xbf16, #tpu.memory_space<vmem>>, vector<512x128xbf16>,
    } else {
    }
    return
  }
  func.func @transform_0(%arg0: i32, %arg1: i32, %arg2: i32) -> (i32, i32) {
    %c0_i32 = arith.constant 0 : i32
    return %arg0, %arg2 : i32, i32
  }
  func.func @transform_1(%arg0: i32, %arg1: i32, %arg2: i32) -> (i32, i32) {
    %c0_i32 = arith.constant 0 : i32
    return %arg2, %arg1 : i32, i32
  }
  func.func @transform_2(%arg0: i32, %arg1: i32, %arg2: i32) -> (i32, i32) {
    %c0_i32 = arith.constant 0 : i32
    %c0_i32_0 = arith.constant 0 : i32
    return %c0_i32, %arg1 : i32, i32
  }
  func.func @transform_3(%arg0: i32, %arg1: i32, %arg2: i32) -> (i32, i32) {
    %c0_i32 = arith.constant 0 : i32
    %c0_i32_0 = arith.constant 0 : i32
    return %c0_i32, %arg1 : i32, i32
  }
  func.func @transform_4(%arg0: i32, %arg1: i32, %arg2: i32) -> (i32, i32) {
    %c0_i32 = arith.constant 0 : i32
    return %arg0, %arg1 : i32, i32
  }
}

</mosaic_0001>

<llo_original>
// kernel: _conv2d_impl.1
$region0: #{_conv2d_impl.1}
  #allocation0 [shape = 'u32[]', space=smem, size = 0x4, offset = 0x4, fixed_abs, tag = 'smem constant byte address 0x4 - core index']
  #allocation1 [shape = 'u32[72,128]{1,0:T(1,128)}', space=vmem, size = 0x9000, scoped, tag = 'internal scratch']
  #allocation2 [shape = 'f32[512,128]{1,0:T(8,128)}', space=vmem, size = 0x40000, scoped, tag = 'scratch operand']
  %s0 = inlined_call_operand.vmem [shape: bf16[1024,256], index: 0, kind: input, shape index: {}]
  %s1 = inlined_call_operand.vmem [shape: bf16[256,128], index: 1, kind: input, shape index: {}]
  %s2 = inlined_call_operand.vmem [shape: f32[1,128], index: 2, kind: input, shape index: {}]
  %s3 = inlined_call_operand.vmem [shape: f32[1,128], index: 3, kind: input, shape index: {}]
  %s4 = inlined_call_operand.hbm [shape: bf16[1024,128], index: 4, kind: output, shape index: {}]
  %s5 = sld [smem:[#allocation0]]
  $region57: #{_conv2d_impl.1} parent=0
    _
  %s7 = ssub.s32 1, %s5
  %s8 = scalar_select 0, %s7, %s5
  $region1: #{_conv2d_impl.1} parent=0
    #allocation3 [shape = 'u8[262144]{0}', space=vmem, size = 0x40000, scoped, tag = 'output window, operand 0']
    #allocation4 [shape = 's32[2]{0}', space=sflag, size = 0x8, scoped, tag = 'scoped memory for _conv2d_impl.1']
    %9 = vsyncpa [#allocation4], 0
    %s10 = scalar_lea.sflag [#allocation4], 1
    %11 = vsyncpa %s10, 0
    loop: start=0, step=1, limit=4
    $region2: #{_conv2d_impl.1} parent=1 // loop_pre_header
      _
    $region3: #{_conv2d_impl.1} parent=1 // loop_header
      %s13 = sphi 0, %s17
      %p14 = scmp.ge.s32.totalorder %s13, 4
      %s20 = sphi 0, %s39
      %s21 = sphi 0, %s35
      %s22 = sphi 0, %s31
      %s23 = sphi 0, %s20
      %s24 = sphi 0, %s21
      %s25 = sphi 0, %s22
      %s26 = sphi 0, %s23
      %s27 = sphi 0, %s24
      %s28 = sphi 0, %s25
      %s44 = sphi 0, %s46
      %s47 = sphi 0, %s44
      %s48 = sphi 0, %s47
      %s64 = sphi 0, %s48
      %s72 = sphi 0, %s74
      %s75 = sphi 0, %s72
      %s76 = sphi 0, %s75
      %s92 = sphi 0, %s76
      %s98 = sphi 0, %s100
      %s101 = sphi 0, %s98
      %s102 = sphi 0, %s101
      %s118 = sphi 0, %s102
      %s124 = sphi 0, %s126
      %s127 = sphi 0, %s124
      %s128 = sphi 0, %s127
      %s144 = sphi 0, %s128
      %s152 = sphi 0, %s154
      %s155 = sphi 0, %s152
      %s156 = sphi 0, %s155
      %s172 = sphi 0, %s156
    $region4: #{_conv2d_impl.1} parent=1 // loop_header_branch
      %16 = sbr.rel (%p14) target = $region8
    $region5: #{_conv2d_impl.1} parent=1 // loop_body
      %s18 = ssub.s32 %s13, 1
      %s19 = ssub.s32 %s13, 2
      %s29 = sadd.s32 1, %s22
      %p30 = scmp.ge.s32.totalorder %s29, 1
      %s31 = scalar_select %p30, 0, %s29
      %s32 = sadd.s32 1, %s21
      %s33 = scalar_select %p30, %s32, %s21
      %p34 = scmp.ge.s32.totalorder %s33, 1
      %s35 = scalar_select %p34, 0, %s33
      %s36 = sadd.s32 1, %s20
      %s37 = scalar_select %p34, %s36, %s20
      %p38 = scmp.ge.s32.totalorder %s37, 2
      %s39 = scalar_select %p38, 0, %s37
      %s40 = ssub.s32 %s20, %s39
      %s41 = ssub.s32 %s22, %s31
      %s42 = sor.u32 %s40, %s41
      %p43 = scmp.eq.s32.totalorder %s42, 0
      %s45 = sadd.s32 %s44, 1
      %s46 = scalar_select %p43, %s44, %s45
      %p49 = pneg %p43
      %p50 = scmp.eq.s32.totalorder %s13, 1
      %p51 = por %p49, %p50
      %p52 = scmp.ne.s32.totalorder %s44, %s47
      %p53 = scmp.eq.s32.totalorder %s13, 0
      %p54 = por %p52, %p53
      %p55 = scmp.ne.s32.totalorder %s44, %s47
      %p56 = scmp.eq.s32.totalorder %s18, 1
      %p57 = por %p55, %p56
      %p58 = scmp.ne.s32.totalorder %s47, %s48
      %p59 = scmp.eq.s32.totalorder %s18, 0
      %p60 = por %p58, %p59
      %p61 = scmp.ne.s32.totalorder %s47, %s48
      %p62 = scmp.eq.s32.totalorder %s19, 1
      %p63 = por %p61, %p62
      %p65 = scmp.ne.s32.totalorder %s48, %s64
      %p66 = scmp.eq.s32.totalorder %s19, 0
      %p67 = por %p65, %p66
      %s68 = ssub.s32 %s22, %s31
      %s69 = ssub.s32 %s21, %s35
      %s70 = sor.u32 %s68, %s69
      %p71 = scmp.eq.s32.totalorder %s70, 0
      %s73 = sadd.s32 %s72, 1
      %s74 = scalar_select %p71, %s72, %s73
      %p77 = pneg %p71
      %p78 = scmp.eq.s32.totalorder %s13, 1
      %p79 = por %p77, %p78
      %p80 = scmp.ne.s32.totalorder %s72, %s75
      %p81 = scmp.eq.s32.totalorder %s13, 0
      %p82 = por %p80, %p81
      %p83 = scmp.ne.s32.totalorder %s72, %s75
      %p84 = scmp.eq.s32.totalorder %s18, 1
      %p85 = por %p83, %p84
      %p86 = scmp.ne.s32.totalorder %s75, %s76
      %p87 = scmp.eq.s32.totalorder %s18, 0
      %p88 = por %p86, %p87
      %p89 = scmp.ne.s32.totalorder %s75, %s76
      %p90 = scmp.eq.s32.totalorder %s19, 1
      %p91 = por %p89, %p90
      %p93 = scmp.ne.s32.totalorder %s76, %s92
      %p94 = scmp.eq.s32.totalorder %s19, 0
      %p95 = por %p93, %p94
      %s96 = ssub.s32 %s21, %s35
      %p97 = scmp.eq.s32.totalorder %s96, 0
      %s99 = sadd.s32 %s98, 1
      %s100 = scalar_select %p97, %s98, %s99
      %p103 = pneg %p97
      %p104 = scmp.eq.s32.totalorder %s13, 1
      %p105 = por %p103, %p104
      %p106 = scmp.ne.s32.totalorder %s98, %s101
      %p107 = scmp.eq.s32.totalorder %s13, 0
      %p108 = por %p106, %p107
      %p109 = scmp.ne.s32.totalorder %s98, %s101
      %p110 = scmp.eq.s32.totalorder %s18, 1
      %p111 = por %p109, %p110
      %p112 = scmp.ne.s32.totalorder %s101, %s102
      %p113 = scmp.eq.s32.totalorder %s18, 0
      %p114 = por %p112, %p113
      %p115 = scmp.ne.s32.totalorder %s101, %s102
      %p116 = scmp.eq.s32.totalorder %s19, 1
      %p117 = por %p115, %p116
      %p119 = scmp.ne.s32.totalorder %s102, %s118
      %p120 = scmp.eq.s32.totalorder %s19, 0
      %p121 = por %p119, %p120
      %s122 = ssub.s32 %s21, %s35
      %p123 = scmp.eq.s32.totalorder %s122, 0
      %s125 = sadd.s32 %s124, 1
      %s126 = scalar_select %p123, %s124, %s125
      %p129 = pneg %p123
      %p130 = scmp.eq.s32.totalorder %s13, 1
      %p131 = por %p129, %p130
      %p132 = scmp.ne.s32.totalorder %s124, %s127
      %p133 = scmp.eq.s32.totalorder %s13, 0
      %p134 = por %p132, %p133
      %p135 = scmp.ne.s32.totalorder %s124, %s127
      %p136 = scmp.eq.s32.totalorder %s18, 1
      %p137 = por %p135, %p136
      %p138 = scmp.ne.s32.totalorder %s127, %s128
      %p139 = scmp.eq.s32.totalorder %s18, 0
      %p140 = por %p138, %p139
      %p141 = scmp.ne.s32.totalorder %s127, %s128
      %p142 = scmp.eq.s32.totalorder %s19, 1
      %p143 = por %p141, %p142
      %p145 = scmp.ne.s32.totalorder %s128, %s144
      %p146 = scmp.eq.s32.totalorder %s19, 0
      %p147 = por %p145, %p146
      %s148 = ssub.s32 %s20, %s39
      %s149 = ssub.s32 %s21, %s35
      %s150 = sor.u32 %s148, %s149
      %p151 = scmp.eq.s32.totalorder %s150, 0
      %s153 = sadd.s32 %s152, 1
      %s154 = scalar_select %p151, %s152, %s153
      %p157 = pneg %p151
      %p158 = scmp.eq.s32.totalorder %s13, 1
      %p159 = por %p157, %p158
      %p160 = scmp.ne.s32.totalorder %s152, %s155
      %p161 = scmp.eq.s32.totalorder %s13, 0
      %p162 = por %p160, %p161
      %p163 = scmp.ne.s32.totalorder %s152, %s155
      %p164 = scmp.eq.s32.totalorder %s18, 1
      %p165 = por %p163, %p164
      %p166 = scmp.ne.s32.totalorder %s155, %s156
      %p167 = scmp.eq.s32.totalorder %s18, 0
      %p168 = por %p166, %p167
      %p169 = scmp.ne.s32.totalorder %s155, %s156
      %p170 = scmp.eq.s32.totalorder %s19, 1
      %p171 = por %p169, %p170
      %p173 = scmp.ne.s32.totalorder %s156, %s172
      %p174 = scmp.eq.s32.totalorder %s19, 0
      %p175 = por %p173, %p174
      %p176 = scmp.le.s32.totalorder 1, %s13
      %p177 = scmp.lt.s32.totalorder %s13, 3
      %p178 = pnand %p176, %p177
      %p179 = pneg %p178
      // Predicated region
      $region9: #{_conv2d_impl.1} parent=5 // pred_check
        _
      $region10: #{_conv2d_impl.1} parent=5 // pred_check_branch
        %181 = sbr.rel (%p178) target = $region12
      $region11: #{_conv2d_impl.1} parent=5 // pred_region
        %s182 = ssub.s32 %s13, 1
        // Predicated region
        $region13: #{_conv2d_impl.1} parent=11 // pred_check
          %p183 = pneg %p88
        $region14: #{_conv2d_impl.1} parent=11 // pred_check_branch
          %185 = sbr.rel (%p183) target = $region16
        $region15: #{_conv2d_impl.1} parent=11 // pred_region
          %s186 = smul.u32 32, %s25
          %p187 = scmp.lt.s32.totalorder %s186, 31
          %s188 = scalar_select %p187, %s186, 31
          %p189 = scmp.lt.s32.totalorder %s24, 0
          %s190 = scalar_select %p189, %s24, 0
          %s191 = sadd.s32 %s190, %s188
          %s192 = smul.addr %s191, 4
          %s193 = scalar_lea.vmem %s1, %s192
          %s194 = smul.u32 32, %s25
        $region16: #{_conv2d_impl.1} parent=11 // pred_fallthru
          _
        // Predicated region
        $region17: #{_conv2d_impl.1} parent=11 // pred_check
          %p195 = pneg %p114
        $region18: #{_conv2d_impl.1} parent=11 // pred_check_branch
          %197 = sbr.rel (%p195) target = $region20
        $region19: #{_conv2d_impl.1} parent=11 // pred_region
          %p198 = scmp.lt.s32.totalorder %s24, 0
          %s199 = scalar_select %p198, %s24, 0
          %s200 = scalar_lea.vmem %s2, %s199
        $region20: #{_conv2d_impl.1} parent=11 // pred_fallthru
          _
        // Predicated region
        $region21: #{_conv2d_impl.1} parent=11 // pred_check
          %p201 = pneg %p140
        $region22: #{_conv2d_impl.1} parent=11 // pred_check_branch
          %203 = sbr.rel (%p201) target = $region24
        $region23: #{_conv2d_impl.1} parent=11 // pred_region
          %p204 = scmp.lt.s32.totalorder %s24, 0
          %s205 = scalar_select %p204, %s24, 0
          %s206 = scalar_lea.vmem %s3, %s205
        $region24: #{_conv2d_impl.1} parent=11 // pred_fallthru
          _
      $region12: #{_conv2d_impl.1} parent=5 // pred_fallthru
        _
      %p207 = scmp.lt.s32.totalorder %s13, 2
      // Predicated region
      $region25: #{_conv2d_impl.1} parent=5 // pred_check
        %p208 = pneg %p207
      $region26: #{_conv2d_impl.1} parent=5 // pred_check_branch
        %210 = sbr.rel (%p208) target = $region28
      $region27: #{_conv2d_impl.1} parent=5 // pred_region
        // Predicated region
        $region29: #{_conv2d_impl.1} parent=27 // pred_check
          %p211 = pneg %p54
        $region30: #{_conv2d_impl.1} parent=27 // pred_check_branch
          %213 = sbr.rel (%p211) target = $region32
        $region31: #{_conv2d_impl.1} parent=27 // pred_region
          %s214 = smul.u32 64, %s20
          %s215 = smul.u32 2, %s22
          %p216 = scmp.lt.s32.totalorder %s214, 127
          %s217 = scalar_select %p216, %s214, 127
          %p218 = scmp.lt.s32.totalorder %s215, 1
          %s219 = scalar_select %p218, %s215, 1
          %s220 = smul.addr %s217, 2
          %s221 = sadd.s32 %s219, %s220
          %s222 = smul.addr %s221, 4
          %s223 = scalar_lea.vmem %s0, %s222
          %s224 = smul.u32 64, %s20
          %s225 = smul.u32 2, %s22
        $region32: #{_conv2d_impl.1} parent=27 // pred_fallthru
          _
      $region28: #{_conv2d_impl.1} parent=5 // pred_fallthru
        _
      %p226 = scmp.le.s32.totalorder 1, %s13
      %p227 = scmp.lt.s32.totalorder %s13, 3
      %p228 = pnand %p226, %p227
      %p229 = pneg %p228
      // Predicated region
      $region33: #{_conv2d_impl.1} parent=5 // pred_check
        _
      $region34: #{_conv2d_impl.1} parent=5 // pred_check_branch
        %231 = sbr.rel (%p228) target = $region36
      $region35: #{_conv2d_impl.1} parent=5 // pred_region
        %s232 = ssub.s32 %s13, 1
        %s233 = smul.u32 64, %s23
        %s234 = smul.u32 2, %s25
        %p235 = scmp.lt.s32.totalorder %s233, 127
        %s236 = scalar_select %p235, %s233, 127
        %p237 = scmp.lt.s32.totalorder %s234, 1
        %s238 = scalar_select %p237, %s234, 1
        %s239 = smul.addr %s236, 2
        %s240 = sadd.s32 %s238, %s239
        %s241 = smul.addr %s240, 4
        %s242 = scalar_lea.vmem %s0, %s241
        %p243 = pneg %p60
        %p244 = pneg %p57
        %s245 = smul.u32 32, %s25
        %p246 = scmp.lt.s32.totalorder %s245, 31
        %s247 = scalar_select %p246, %s245, 31
        %p248 = scmp.lt.s32.totalorder %s24, 0
        %s249 = scalar_select %p248, %s24, 0
        %s250 = sadd.s32 %s249, %s247
        %s251 = smul.addr %s250, 4
        %s252 = scalar_lea.vmem %s1, %s251
        %p253 = pneg %p88
        %p254 = pneg %p85
        %p255 = scmp.lt.s32.totalorder %s24, 0
        %s256 = scalar_select %p255, %s24, 0
        %s257 = scalar_lea.vmem %s2, %s256
        %p258 = pneg %p114
        %p259 = pneg %p111
        %p260 = scmp.lt.s32.totalorder %s24, 0
        %s261 = scalar_select %p260, %s24, 0
        %s262 = scalar_lea.vmem %s3, %s261
        %p263 = pneg %p140
        %p264 = pneg %p137
        %p265 = pneg %p168
        %p266 = pneg %p165
        %s267 = sand.u32 %s155, 1
        %s268 = scalar_lea.sflag [#allocation4], %s267
        %s269 = sand.u32 %s155, 1
        %s270 = smul.addr %s269, 256
        %s271 = scalar_lea.vmem [#allocation3], %s270
        %s272 = smul.u32 64, %s23
        %s273 = smul.u32 2, %s25
        %p274 = scmp.lt.s32.totalorder %s272, 127
        %s275 = scalar_select %p274, %s272, 127
        %p276 = scmp.lt.s32.totalorder %s273, 1
        %s277 = scalar_select %p276, %s273, 1
        %s278 = smul.addr %s275, 2
        %s279 = sadd.s32 %s277, %s278
        %s280 = smul.addr %s279, 4
        %s281 = scalar_lea.vmem %s0, %s280
        %s282 = smul.u32 64, %s23
        %s283 = smul.u32 2, %s25
        %s284 = smul.u32 32, %s25
        %p285 = scmp.lt.s32.totalorder %s284, 31
        %s286 = scalar_select %p285, %s284, 31
        %p287 = scmp.lt.s32.totalorder %s24, 0
        %s288 = scalar_select %p287, %s24, 0
        %s289 = sadd.s32 %s288, %s286
        %s290 = smul.addr %s289, 4
        %s291 = scalar_lea.vmem %s1, %s290
        %s292 = smul.u32 32, %s25
        %p293 = scmp.lt.s32.totalorder %s24, 0
        %s294 = scalar_select %p293, %s24, 0
        %s295 = scalar_lea.vmem %s2, %s294
        %p296 = scmp.lt.s32.totalorder %s24, 0
        %s297 = scalar_select %p296, %s24, 0
        %s298 = scalar_lea.vmem %s3, %s297
        %s299 = smul.u32 64, %s23
        %p300 = scmp.eq.s32.totalorder %s25, 0
        // Predicated region
        $region37: #{_conv2d_impl.1} parent=35 // pred_check
          %p301 = pneg %p300
        $region38: #{_conv2d_impl.1} parent=35 // pred_check_branch
          %303 = sbr.rel (%p301) target = $region40
        $region39: #{_conv2d_impl.1} parent=35 // pred_region
          %304 = vst [vmem:[#allocation2] sm:$0xff] 0.0
          %305 = vst [vmem:[#allocation2 + $0x8] sm:$0xff] 0.0
          %306 = vst [vmem:[#allocation2 + $0x10] sm:$0xff] 0.0
          %307 = vst [vmem:[#allocation2 + $0x18] sm:$0xff] 0.0
          %308 = vst [vmem:[#allocation2 + $0x20] sm:$0xff] 0.0
          %309 = vst [vmem:[#allocation2 + $0x28] sm:$0xff] 0.0
          %310 = vst [vmem:[#allocation2 + $0x30] sm:$0xff] 0.0
          %311 = vst [vmem:[#allocation2 + $0x38] sm:$0xff] 0.0
          %312 = vst [vmem:[#allocation2 + $0x40] sm:$0xff] 0.0
          %313 = vst [vmem:[#allocation2 + $0x48] sm:$0xff] 0.0
          %314 = vst [vmem:[#allocation2 + $0x50] sm:$0xff] 0.0
          %315 = vst [vmem:[#allocation2 + $0x58] sm:$0xff] 0.0
          %316 = vst [vmem:[#allocation2 + $0x60] sm:$0xff] 0.0
          %317 = vst [vmem:[#allocation2 + $0x68] sm:$0xff] 0.0
          %318 = vst [vmem:[#allocation2 + $0x70] sm:$0xff] 0.0
          %319 = vst [vmem:[#allocation2 + $0x78] sm:$0xff] 0.0
          %320 = vst [vmem:[#allocation2 + $0x80] sm:$0xff] 0.0
          %321 = vst [vmem:[#allocation2 + $0x88] sm:$0xff] 0.0
          %322 = vst [vmem:[#allocation2 + $0x90] sm:$0xff] 0.0
          %323 = vst [vmem:[#allocation2 + $0x98] sm:$0xff] 0.0
          %324 = vst [vmem:[#allocation2 + $0xa0] sm:$0xff] 0.0
          %325 = vst [vmem:[#allocation2 + $0xa8] sm:$0xff] 0.0
          %326 = vst [vmem:[#allocation2 + $0xb0] sm:$0xff] 0.0
          %327 = vst [vmem:[#allocation2 + $0xb8] sm:$0xff] 0.0
          %328 = vst [vmem:[#allocation2 + $0xc0] sm:$0xff] 0.0
          %329 = vst [vmem:[#allocation2 + $0xc8] sm:$0xff] 0.0
          %330 = vst [vmem:[#allocation2 + $0xd0] sm:$0xff] 0.0
          %331 = vst [vmem:[#allocation2 + $0xd8] sm:$0xff] 0.0
          %332 = vst [vmem:[#allocation2 + $0xe0] sm:$0xff] 0.0
          %333 = vst [vmem:[#allocation2 + $0xe8] sm:$0xff] 0.0
          %334 = vst [vmem:[#allocation2 + $0xf0] sm:$0xff] 0.0
          %335 = vst [vmem:[#allocation2 + $0xf8] sm:$0xff] 0.0
          %336 = vst [vmem:[#allocation2 + $0x100] sm:$0xff] 0.0
          %337 = vst [vmem:[#allocation2 + $0x108] sm:$0xff] 0.0
          %338 = vst [vmem:[#allocation2 + $0x110] sm:$0xff] 0.0
          %339 = vst [vmem:[#allocation2 + $0x118] sm:$0xff] 0.0
          %340 = vst [vmem:[#allocation2 + $0x120] sm:$0xff] 0.0
          %341 = vst [vmem:[#allocation2 + $0x128] sm:$0xff] 0.0
          %342 = vst [vmem:[#allocation2 + $0x130] sm:$0xff] 0.0
          %343 = vst [vmem:[#allocation2 + $0x138] sm:$0xff] 0.0
          %344 = vst [vmem:[#allocation2 + $0x140] sm:$0xff] 0.0
          %345 = vst [vmem:[#allocation2 + $0x148] sm:$0xff] 0.0
          %346 = vst [vmem:[#allocation2 + $0x150] sm:$0xff] 0.0
          %347 = vst [vmem:[#allocation2 + $0x158] sm:$0xff] 0.0
          %348 = vst [vmem:[#allocation2 + $0x160] sm:$0xff] 0.0
          %349 = vst [vmem:[#allocation2 + $0x168] sm:$0xff] 0.0
          %350 = vst [vmem:[#allocation2 + $0x170] sm:$0xff] 0.0
          %351 = vst [vmem:[#allocation2 + $0x178] sm:$0xff] 0.0
          %352 = vst [vmem:[#allocation2 + $0x180] sm:$0xff] 0.0
          %353 = vst [vmem:[#allocation2 + $0x188] sm:$0xff] 0.0
          %354 = vst [vmem:[#allocation2 + $0x190] sm:$0xff] 0.0
          %355 = vst [vmem:[#allocation2 + $0x198] sm:$0xff] 0.0
          %356 = vst [vmem:[#allocation2 + $0x1a0] sm:$0xff] 0.0
          %357 = vst [vmem:[#allocation2 + $0x1a8] sm:$0xff] 0.0
          %358 = vst [vmem:[#allocation2 + $0x1b0] sm:$0xff] 0.0
          %359 = vst [vmem:[#allocation2 + $0x1b8] sm:$0xff] 0.0
          %360 = vst [vmem:[#allocation2 + $0x1c0] sm:$0xff] 0.0
          %361 = vst [vmem:[#allocation2 + $0x1c8] sm:$0xff] 0.0
          %362 = vst [vmem:[#allocation2 + $0x1d0] sm:$0xff] 0.0
          %363 = vst [vmem:[#allocation2 + $0x1d8] sm:$0xff] 0.0
          %364 = vst [vmem:[#allocation2 + $0x1e0] sm:$0xff] 0.0
          %365 = vst [vmem:[#allocation2 + $0x1e8] sm:$0xff] 0.0
          %366 = vst [vmem:[#allocation2 + $0x1f0] sm:$0xff] 0.0
          %367 = vst [vmem:[#allocation2 + $0x1f8] sm:$0xff] 0.0
        $region40: #{_conv2d_impl.1} parent=35 // pred_fallthru
          _
        %v368 = vld [vmem:[#allocation2] sm:$0xff]
        %v369 = vld [vmem:[#allocation2 + $0x8] sm:$0xff]
        %v370 = vld [vmem:[#allocation2 + $0x10] sm:$0xff]
        %v371 = vld [vmem:[#allocation2 + $0x18] sm:$0xff]
        %v372 = vld [vmem:[#allocation2 + $0x20] sm:$0xff]
        %v373 = vld [vmem:[#allocation2 + $0x28] sm:$0xff]
        %v374 = vld [vmem:[#allocation2 + $0x30] sm:$0xff]
        %v375 = vld [vmem:[#allocation2 + $0x38] sm:$0xff]
        %v376 = vld [vmem:[#allocation2 + $0x40] sm:$0xff]
        %v377 = vld [vmem:[#allocation2 + $0x48] sm:$0xff]
        %v378 = vld [vmem:[#allocation2 + $0x50] sm:$0xff]
        %v379 = vld [vmem:[#allocation2 + $0x58] sm:$0xff]
        %v380 = vld [vmem:[#allocation2 + $0x60] sm:$0xff]
        %v381 = vld [vmem:[#allocation2 + $0x68] sm:$0xff]
        %v382 = vld [vmem:[#allocation2 + $0x70] sm:$0xff]
        %v383 = vld [vmem:[#allocation2 + $0x78] sm:$0xff]
        %v384 = vld [vmem:[#allocation2 + $0x80] sm:$0xff]
        %v385 = vld [vmem:[#allocation2 + $0x88] sm:$0xff]
        %v386 = vld [vmem:[#allocation2 + $0x90] sm:$0xff]
        %v387 = vld [vmem:[#allocation2 + $0x98] sm:$0xff]
        %v388 = vld [vmem:[#allocation2 + $0xa0] sm:$0xff]
        %v389 = vld [vmem:[#allocation2 + $0xa8] sm:$0xff]
        %v390 = vld [vmem:[#allocation2 + $0xb0] sm:$0xff]
        %v391 = vld [vmem:[#allocation2 + $0xb8] sm:$0xff]
        %v392 = vld [vmem:[#allocation2 + $0xc0] sm:$0xff]
        %v393 = vld [vmem:[#allocation2 + $0xc8] sm:$0xff]
        %v394 = vld [vmem:[#allocation2 + $0xd0] sm:$0xff]
        %v395 = vld [vmem:[#allocation2 + $0xd8] sm:$0xff]
        %v396 = vld [vmem:[#allocation2 + $0xe0] sm:$0xff]
        %v397 = vld [vmem:[#allocation2 + $0xe8] sm:$0xff]
        %v398 = vld [vmem:[#allocation2 + $0xf0] sm:$0xff]
        %v399 = vld [vmem:[#allocation2 + $0xf8] sm:$0xff]
        %v400 = vld [vmem:[#allocation2 + $0x100] sm:$0xff]
        %v401 = vld [vmem:[#allocation2 + $0x108] sm:$0xff]
        %v402 = vld [vmem:[#allocation2 + $0x110] sm:$0xff]
        %v403 = vld [vmem:[#allocation2 + $0x118] sm:$0xff]
        %v404 = vld [vmem:[#allocation2 + $0x120] sm:$0xff]
        %v405 = vld [vmem:[#allocation2 + $0x128] sm:$0xff]
        %v406 = vld [vmem:[#allocation2 + $0x130] sm:$0xff]
        %v407 = vld [vmem:[#allocation2 + $0x138] sm:$0xff]
        %v408 = vld [vmem:[#allocation2 + $0x140] sm:$0xff]
        %v409 = vld [vmem:[#allocation2 + $0x148] sm:$0xff]
        %v410 = vld [vmem:[#allocation2 + $0x150] sm:$0xff]
        %v411 = vld [vmem:[#allocation2 + $0x158] sm:$0xff]
        %v412 = vld [vmem:[#allocation2 + $0x160] sm:$0xff]
        %v413 = vld [vmem:[#allocation2 + $0x168] sm:$0xff]
        %v414 = vld [vmem:[#allocation2 + $0x170] sm:$0xff]
        %v415 = vld [vmem:[#allocation2 + $0x178] sm:$0xff]
        %v416 = vld [vmem:[#allocation2 + $0x180] sm:$0xff]
        %v417 = vld [vmem:[#allocation2 + $0x188] sm:$0xff]
        %v418 = vld [vmem:[#allocation2 + $0x190] sm:$0xff]
        %v419 = vld [vmem:[#allocation2 + $0x198] sm:$0xff]
        %v420 = vld [vmem:[#allocation2 + $0x1a0] sm:$0xff]
        %v421 = vld [vmem:[#allocation2 + $0x1a8] sm:$0xff]
        %v422 = vld [vmem:[#allocation2 + $0x1b0] sm:$0xff]
        %v423 = vld [vmem:[#allocation2 + $0x1b8] sm:$0xff]
        %v424 = vld [vmem:[#allocation2 + $0x1c0] sm:$0xff]
        %v425 = vld [vmem:[#allocation2 + $0x1c8] sm:$0xff]
        %v426 = vld [vmem:[#allocation2 + $0x1d0] sm:$0xff]
        %v427 = vld [vmem:[#allocation2 + $0x1d8] sm:$0xff]
        %v428 = vld [vmem:[#allocation2 + $0x1e0] sm:$0xff]
        %v429 = vld [vmem:[#allocation2 + $0x1e8] sm:$0xff]
        %v430 = vld [vmem:[#allocation2 + $0x1f0] sm:$0xff]
        %v431 = vld [vmem:[#allocation2 + $0x1f8] sm:$0xff]
        %v432 = vld [vmem:[%s281] sm:$0xff]
        %v433 = vld [vmem:[%s281 + $0x8] sm:$0xff]
        %v434 = vld [vmem:[%s281 + $0x10] sm:$0xff]
        %v435 = vld [vmem:[%s281 + $0x18] sm:$0xff]
        %v436 = vld [vmem:[%s281 + $0x20] sm:$0xff]
        %v437 = vld [vmem:[%s281 + $0x28] sm:$0xff]
        %v438 = vld [vmem:[%s281 + $0x30] sm:$0xff]
        %v439 = vld [vmem:[%s281 + $0x38] sm:$0xff]
        %v440 = vld [vmem:[%s281 + $0x40] sm:$0xff]
        %v441 = vld [vmem:[%s281 + $0x48] sm:$0xff]
        %v442 = vld [vmem:[%s281 + $0x50] sm:$0xff]
        %v443 = vld [vmem:[%s281 + $0x58] sm:$0xff]
        %v444 = vld [vmem:[%s281 + $0x60] sm:$0xff]
        %v445 = vld [vmem:[%s281 + $0x68] sm:$0xff]
        %v446 = vld [vmem:[%s281 + $0x70] sm:$0xff]
        %v447 = vld [vmem:[%s281 + $0x78] sm:$0xff]
        %v448 = vld [vmem:[%s281 + $0x80] sm:$0xff]
        %v449 = vld [vmem:[%s281 + $0x88] sm:$0xff]
        %v450 = vld [vmem:[%s281 + $0x90] sm:$0xff]
        %v451 = vld [vmem:[%s281 + $0x98] sm:$0xff]
        %v452 = vld [vmem:[%s281 + $0xa0] sm:$0xff]
        %v453 = vld [vmem:[%s281 + $0xa8] sm:$0xff]
        %v454 = vld [vmem:[%s281 + $0xb0] sm:$0xff]
        %v455 = vld [vmem:[%s281 + $0xb8] sm:$0xff]
        %v456 = vld [vmem:[%s281 + $0xc0] sm:$0xff]
        %v457 = vld [vmem:[%s281 + $0xc8] sm:$0xff]
        %v458 = vld [vmem:[%s281 + $0xd0] sm:$0xff]
        %v459 = vld [vmem:[%s281 + $0xd8] sm:$0xff]
        %v460 = vld [vmem:[%s281 + $0xe0] sm:$0xff]
        %v461 = vld [vmem:[%s281 + $0xe8] sm:$0xff]
        %v462 = vld [vmem:[%s281 + $0xf0] sm:$0xff]
        %v463 = vld [vmem:[%s281 + $0xf8] sm:$0xff]
        %v464 = vld [vmem:[%s281 + $0x100] sm:$0xff]
        %v465 = vld [vmem:[%s281 + $0x108] sm:$0xff]
        %v466 = vld [vmem:[%s281 + $0x110] sm:$0xff]
        %v467 = vld [vmem:[%s281 + $0x118] sm:$0xff]
        %v468 = vld [vmem:[%s281 + $0x120] sm:$0xff]
        %v469 = vld [vmem:[%s281 + $0x128] sm:$0xff]
        %v470 = vld [vmem:[%s281 + $0x130] sm:$0xff]
        %v471 = vld [vmem:[%s281 + $0x138] sm:$0xff]
        %v472 = vld [vmem:[%s281 + $0x140] sm:$0xff]
        %v473 = vld [vmem:[%s281 + $0x148] sm:$0xff]
        %v474 = vld [vmem:[%s281 + $0x150] sm:$0xff]
        %v475 = vld [vmem:[%s281 + $0x158] sm:$0xff]
        %v476 = vld [vmem:[%s281 + $0x160] sm:$0xff]
        %v477 = vld [vmem:[%s281 + $0x168] sm:$0xff]
        %v478 = vld [vmem:[%s281 + $0x170] sm:$0xff]
        %v479 = vld [vmem:[%s281 + $0x178] sm:$0xff]
        %v480 = vld [vmem:[%s281 + $0x180] sm:$0xff]
        %v481 = vld [vmem:[%s281 + $0x188] sm:$0xff]
        %v482 = vld [vmem:[%s281 + $0x190] sm:$0xff]
        %v483 = vld [vmem:[%s281 + $0x198] sm:$0xff]
        %v484 = vld [vmem:[%s281 + $0x1a0] sm:$0xff]
        %v485 = vld [vmem:[%s281 + $0x1a8] sm:$0xff]
        %v486 = vld [vmem:[%s281 + $0x1b0] sm:$0xff]
        %v487 = vld [vmem:[%s281 + $0x1b8] sm:$0xff]
        %v488 = vld [vmem:[%s281 + $0x1c0] sm:$0xff]
        %v489 = vld [vmem:[%s281 + $0x1c8] sm:$0xff]
        %v490 = vld [vmem:[%s281 + $0x1d0] sm:$0xff]
        %v491 = vld [vmem:[%s281 + $0x1d8] sm:$0xff]
        %v492 = vld [vmem:[%s281 + $0x1e0] sm:$0xff]
        %v493 = vld [vmem:[%s281 + $0x1e8] sm:$0xff]
        %v494 = vld [vmem:[%s281 + $0x1f0] sm:$0xff]
        %v495 = vld [vmem:[%s281 + $0x1f8] sm:$0xff]
        %v496 = vld [vmem:[%s291] sm:$0xf]
        %v497 = vld [vmem:[%s291 + $0x4] sm:$0xf]
        %v498 = vld [vmem:[%s291 + $0x8] sm:$0xf]
        %v499 = vld [vmem:[%s291 + $0xc] sm:$0xf]
        %v500 = vld [vmem:[%s291 + $0x10] sm:$0xf]
        %v501 = vld [vmem:[%s291 + $0x14] sm:$0xf]
        %v502 = vld [vmem:[%s291 + $0x18] sm:$0xf]
        %v503 = vld [vmem:[%s291 + $0x1c] sm:$0xf]
        %v504 = vld [vmem:[%s291 + $0x20] sm:$0xf]
        %v505 = vld [vmem:[%s291 + $0x24] sm:$0xf]
        %v506 = vld [vmem:[%s291 + $0x28] sm:$0xf]
        %v507 = vld [vmem:[%s291 + $0x2c] sm:$0xf]
        %v508 = vld [vmem:[%s291 + $0x30] sm:$0xf]
        %v509 = vld [vmem:[%s291 + $0x34] sm:$0xf]
        %v510 = vld [vmem:[%s291 + $0x38] sm:$0xf]
        %v511 = vld [vmem:[%s291 + $0x3c] sm:$0xf]
        %v512 = vld [vmem:[%s291 + $0x40] sm:$0xf]
        %v513 = vld [vmem:[%s291 + $0x44] sm:$0xf]
        %v514 = vld [vmem:[%s291 + $0x48] sm:$0xf]
        %v515 = vld [vmem:[%s291 + $0x4c] sm:$0xf]
        %v516 = vld [vmem:[%s291 + $0x50] sm:$0xf]
        %v517 = vld [vmem:[%s291 + $0x54] sm:$0xf]
        %v518 = vld [vmem:[%s291 + $0x58] sm:$0xf]
        %v519 = vld [vmem:[%s291 + $0x5c] sm:$0xf]
        %v520 = vld [vmem:[%s291 + $0x60] sm:$0xf]
        %v521 = vld [vmem:[%s291 + $0x64] sm:$0xf]
        %v522 = vld [vmem:[%s291 + $0x68] sm:$0xf]
        %v523 = vld [vmem:[%s291 + $0x6c] sm:$0xf]
        %v524 = vld [vmem:[%s291 + $0x70] sm:$0xf]
        %v525 = vld [vmem:[%s291 + $0x74] sm:$0xf]
        %v526 = vld [vmem:[%s291 + $0x78] sm:$0xf]
        %v527 = vld [vmem:[%s291 + $0x7c] sm:$0xf]
        %v592 = vunpack.c.l.b16 %v432
        %v593 = vunpack.c.h.b16 %v432
        %v594 = vunpack.c.l.b16 %v433
        %v595 = vunpack.c.h.b16 %v433
        %v596 = vunpack.c.l.b16 %v434
        %v597 = vunpack.c.h.b16 %v434
        %v598 = vunpack.c.l.b16 %v435
        %v599 = vunpack.c.h.b16 %v435
        %v600 = vunpack.c.l.b16 %v436
        %v601 = vunpack.c.h.b16 %v436
        %v602 = vunpack.c.l.b16 %v437
        %v603 = vunpack.c.h.b16 %v437
        %v604 = vunpack.c.l.b16 %v438
        %v605 = vunpack.c.h.b16 %v438
        %v606 = vunpack.c.l.b16 %v439
        %v607 = vunpack.c.h.b16 %v439
        %v608 = vunpack.c.l.b16 %v440
        %v609 = vunpack.c.h.b16 %v440
        %v610 = vunpack.c.l.b16 %v441
        %v611 = vunpack.c.h.b16 %v441
        %v612 = vunpack.c.l.b16 %v442
        %v613 = vunpack.c.h.b16 %v442
        %v614 = vunpack.c.l.b16 %v443
        %v615 = vunpack.c.h.b16 %v443
        %v616 = vunpack.c.l.b16 %v444
        %v617 = vunpack.c.h.b16 %v444
        %v618 = vunpack.c.l.b16 %v445
        %v619 = vunpack.c.h.b16 %v445
        %v620 = vunpack.c.l.b16 %v446
        %v621 = vunpack.c.h.b16 %v446
        %v622 = vunpack.c.l.b16 %v447
        %v623 = vunpack.c.h.b16 %v447
        %v624 = vunpack.c.l.b16 %v448
        %v625 = vunpack.c.h.b16 %v448
        %v626 = vunpack.c.l.b16 %v449
        %v627 = vunpack.c.h.b16 %v449
        %v628 = vunpack.c.l.b16 %v450
        %v629 = vunpack.c.h.b16 %v450
        %v630 = vunpack.c.l.b16 %v451
        %v631 = vunpack.c.h.b16 %v451
        %v632 = vunpack.c.l.b16 %v452
        %v633 = vunpack.c.h.b16 %v452
        %v634 = vunpack.c.l.b16 %v453
        %v635 = vunpack.c.h.b16 %v453
        %v636 = vunpack.c.l.b16 %v454
        %v637 = vunpack.c.h.b16 %v454
        %v638 = vunpack.c.l.b16 %v455
        %v639 = vunpack.c.h.b16 %v455
        %v640 = vunpack.c.l.b16 %v456
        %v641 = vunpack.c.h.b16 %v456
        %v642 = vunpack.c.l.b16 %v457
        %v643 = vunpack.c.h.b16 %v457
        %v644 = vunpack.c.l.b16 %v458
        %v645 = vunpack.c.h.b16 %v458
        %v646 = vunpack.c.l.b16 %v459
        %v647 = vunpack.c.h.b16 %v459
        %v648 = vunpack.c.l.b16 %v460
        %v649 = vunpack.c.h.b16 %v460
        %v650 = vunpack.c.l.b16 %v461
        %v651 = vunpack.c.h.b16 %v461
        %v652 = vunpack.c.l.b16 %v462
        %v653 = vunpack.c.h.b16 %v462
        %v654 = vunpack.c.l.b16 %v463
        %v655 = vunpack.c.h.b16 %v463
        %v656 = vunpack.c.l.b16 %v464
        %v657 = vunpack.c.h.b16 %v464
        %v658 = vunpack.c.l.b16 %v465
        %v659 = vunpack.c.h.b16 %v465
        %v660 = vunpack.c.l.b16 %v466
        %v661 = vunpack.c.h.b16 %v466
        %v662 = vunpack.c.l.b16 %v467
        %v663 = vunpack.c.h.b16 %v467
        %v664 = vunpack.c.l.b16 %v468
        %v665 = vunpack.c.h.b16 %v468
        %v666 = vunpack.c.l.b16 %v469
        %v667 = vunpack.c.h.b16 %v469
        %v668 = vunpack.c.l.b16 %v470
        %v669 = vunpack.c.h.b16 %v470
        %v670 = vunpack.c.l.b16 %v471
        %v671 = vunpack.c.h.b16 %v471
        %v672 = vunpack.c.l.b16 %v472
        %v673 = vunpack.c.h.b16 %v472
        %v674 = vunpack.c.l.b16 %v473
        %v675 = vunpack.c.h.b16 %v473
        %v676 = vunpack.c.l.b16 %v474
        %v677 = vunpack.c.h.b16 %v474
        %v678 = vunpack.c.l.b16 %v475
        %v679 = vunpack.c.h.b16 %v475
        %v680 = vunpack.c.l.b16 %v476
        %v681 = vunpack.c.h.b16 %v476
        %v682 = vunpack.c.l.b16 %v477
        %v683 = vunpack.c.h.b16 %v477
        %v684 = vunpack.c.l.b16 %v478
        %v685 = vunpack.c.h.b16 %v478
        %v686 = vunpack.c.l.b16 %v479
        %v687 = vunpack.c.h.b16 %v479
        %v688 = vunpack.c.l.b16 %v480
        %v689 = vunpack.c.h.b16 %v480
        %v690 = vunpack.c.l.b16 %v481
        %v691 = vunpack.c.h.b16 %v481
        %v692 = vunpack.c.l.b16 %v482
        %v693 = vunpack.c.h.b16 %v482
        %v694 = vunpack.c.l.b16 %v483
        %v695 = vunpack.c.h.b16 %v483
        %v696 = vunpack.c.l.b16 %v484
        %v697 = vunpack.c.h.b16 %v484
        %v698 = vunpack.c.l.b16 %v485
        %v699 = vunpack.c.h.b16 %v485
        %v700 = vunpack.c.l.b16 %v486
        %v701 = vunpack.c.h.b16 %v486
        %v702 = vunpack.c.l.b16 %v487
        %v703 = vunpack.c.h.b16 %v487
        %v704 = vunpack.c.l.b16 %v488
        %v705 = vunpack.c.h.b16 %v488
        %v706 = vunpack.c.l.b16 %v489
        %v707 = vunpack.c.h.b16 %v489
        %v708 = vunpack.c.l.b16 %v490
        %v709 = vunpack.c.h.b16 %v490
        %v710 = vunpack.c.l.b16 %v491
        %v711 = vunpack.c.h.b16 %v491
        %v712 = vunpack.c.l.b16 %v492
        %v713 = vunpack.c.h.b16 %v492
        %v714 = vunpack.c.l.b16 %v493
        %v715 = vunpack.c.h.b16 %v493
        %v716 = vunpack.c.l.b16 %v494
        %v717 = vunpack.c.h.b16 %v494
        %v718 = vunpack.c.l.b16 %v495
        %v719 = vunpack.c.h.b16 %v495
        %v720 = vpack.c.b16 %v594, %v592
        %v721 = vpack.c.b16 %v595, %v593
        %v722 = vpack.c.b16 %v598, %v596
        %v723 = vpack.c.b16 %v599, %v597
        %v724 = vpack.c.b16 %v602, %v600
        %v725 = vpack.c.b16 %v603, %v601
        %v726 = vpack.c.b16 %v606, %v604
        %v727 = vpack.c.b16 %v607, %v605
        %v728 = vpack.c.b16 %v610, %v608
        %v729 = vpack.c.b16 %v611, %v609
        %v730 = vpack.c.b16 %v614, %v612
        %v731 = vpack.c.b16 %v615, %v613
        %v732 = vpack.c.b16 %v618, %v616
        %v733 = vpack.c.b16 %v619, %v617
        %v734 = vpack.c.b16 %v622, %v620
        %v735 = vpack.c.b16 %v623, %v621
        %v736 = vpack.c.b16 %v626, %v624
        %v737 = vpack.c.b16 %v627, %v625
        %v738 = vpack.c.b16 %v630, %v628
        %v739 = vpack.c.b16 %v631, %v629
        %v740 = vpack.c.b16 %v634, %v632
        %v741 = vpack.c.b16 %v635, %v633
        %v742 = vpack.c.b16 %v638, %v636
        %v743 = vpack.c.b16 %v639, %v637
        %v744 = vpack.c.b16 %v642, %v640
        %v745 = vpack.c.b16 %v643, %v641
        %v746 = vpack.c.b16 %v646, %v644
        %v747 = vpack.c.b16 %v647, %v645
        %v748 = vpack.c.b16 %v650, %v648
        %v749 = vpack.c.b16 %v651, %v649
        %v750 = vpack.c.b16 %v654, %v652
        %v751 = vpack.c.b16 %v655, %v653
        %v752 = vpack.c.b16 %v658, %v656
        %v753 = vpack.c.b16 %v659, %v657
        %v754 = vpack.c.b16 %v662, %v660
        %v755 = vpack.c.b16 %v663, %v661
        %v756 = vpack.c.b16 %v666, %v664
        %v757 = vpack.c.b16 %v667, %v665
        %v758 = vpack.c.b16 %v670, %v668
        %v759 = vpack.c.b16 %v671, %v669
        %v760 = vpack.c.b16 %v674, %v672
        %v761 = vpack.c.b16 %v675, %v673
        %v762 = vpack.c.b16 %v678, %v676
        %v763 = vpack.c.b16 %v679, %v677
        %v764 = vpack.c.b16 %v682, %v680
        %v765 = vpack.c.b16 %v683, %v681
        %v766 = vpack.c.b16 %v686, %v684
        %v767 = vpack.c.b16 %v687, %v685
        %v768 = vpack.c.b16 %v690, %v688
        %v769 = vpack.c.b16 %v691, %v689
        %v770 = vpack.c.b16 %v694, %v692
        %v771 = vpack.c.b16 %v695, %v693
        %v772 = vpack.c.b16 %v698, %v696
        %v773 = vpack.c.b16 %v699, %v697
        %v774 = vpack.c.b16 %v702, %v700
        %v775 = vpack.c.b16 %v703, %v701
        %v776 = vpack.c.b16 %v706, %v704
        %v777 = vpack.c.b16 %v707, %v705
        %v778 = vpack.c.b16 %v710, %v708
        %v779 = vpack.c.b16 %v711, %v709
        %v780 = vpack.c.b16 %v714, %v712
        %v781 = vpack.c.b16 %v715, %v713
        %v782 = vpack.c.b16 %v718, %v716
        %v783 = vpack.c.b16 %v719, %v717
        %v880 = vunpack.c.l.b16 %v496
        %v881 = vunpack.c.l.b16 %v497
        %v882 = vunpack.c.l.b16 %v498
        %v883 = vunpack.c.l.b16 %v499
        %v884 = vunpack.c.l.b16 %v500
        %v885 = vunpack.c.l.b16 %v501
        %v886 = vunpack.c.l.b16 %v502
        %v887 = vunpack.c.l.b16 %v503
        %v888 = vunpack.c.l.b16 %v504
        %v889 = vunpack.c.l.b16 %v505
        %v890 = vunpack.c.l.b16 %v506
        %v891 = vunpack.c.l.b16 %v507
        %v892 = vunpack.c.l.b16 %v508
        %v893 = vunpack.c.l.b16 %v509
        %v894 = vunpack.c.l.b16 %v510
        %v895 = vunpack.c.l.b16 %v511
        %v896 = vunpack.c.l.b16 %v512
        %v897 = vunpack.c.l.b16 %v513
        %v898 = vunpack.c.l.b16 %v514
        %v899 = vunpack.c.l.b16 %v515
        %v900 = vunpack.c.l.b16 %v516
        %v901 = vunpack.c.l.b16 %v517
        %v902 = vunpack.c.l.b16 %v518
        %v903 = vunpack.c.l.b16 %v519
        %v904 = vunpack.c.l.b16 %v520
        %v905 = vunpack.c.l.b16 %v521
        %v906 = vunpack.c.l.b16 %v522
        %v907 = vunpack.c.l.b16 %v523
        %v908 = vunpack.c.l.b16 %v524
        %v909 = vunpack.c.l.b16 %v525
        %v910 = vunpack.c.l.b16 %v526
        %v911 = vunpack.c.l.b16 %v527
        %v912 = vpack.c.b16 %v881, %v880
        %v913 = vpack.c.b16 %v883, %v882
        %v914 = vpack.c.b16 %v885, %v884
        %v915 = vpack.c.b16 %v887, %v886
        %v916 = vpack.c.b16 %v889, %v888
        %v917 = vpack.c.b16 %v891, %v890
        %v918 = vpack.c.b16 %v893, %v892
        %v919 = vpack.c.b16 %v895, %v894
        %v920 = vpack.c.b16 %v897, %v896
        %v921 = vpack.c.b16 %v899, %v898
        %v922 = vpack.c.b16 %v901, %v900
        %v923 = vpack.c.b16 %v903, %v902
        %v924 = vpack.c.b16 %v905, %v904
        %v925 = vpack.c.b16 %v907, %v906
        %v926 = vpack.c.b16 %v909, %v908
        %v927 = vpack.c.b16 %v911, %v910
        %944 = vmatpush.bf16.msra.mxu0 %v919
        %945 = vmatpush.bf16.msra.mxu0 %v918
        %946 = vmatpush.bf16.msra.mxu0 %v917
        %947 = vmatpush.bf16.msra.mxu0 %v916
        %948 = vmatpush.bf16.msra.mxu0 %v915
        %949 = vmatpush.bf16.msra.mxu0 %v914
        %950 = vmatpush.bf16.msra.mxu0 %v913
        %951 = vmatpush.bf16.msra.mxu0 %v912
        %952 = vmatmul.bf16.gmra.mxu0 %v720
        %v953 = vpop.f32.mrf.mxu0
        %v954 = vadd.f32 0.0, %v953
        %v955 = vpop.f32.mrf.mxu0
        %v956 = vadd.f32 0.0, %v955
        %957 = vmatmul.bf16.gmra.mxu0 %v722
        %v958 = vpop.f32.mrf.mxu0
        %v959 = vadd.f32 0.0, %v958
        %v960 = vpop.f32.mrf.mxu0
        %v961 = vadd.f32 0.0, %v960
        %962 = vmatmul.bf16.gmra.mxu0 %v724
        %v963 = vpop.f32.mrf.mxu0
        %v964 = vadd.f32 0.0, %v963
        %v965 = vpop.f32.mrf.mxu0
        %v966 = vadd.f32 0.0, %v965
        %967 = vmatmul.bf16.gmra.mxu0 %v726
        %v968 = vpop.f32.mrf.mxu0
        %v969 = vadd.f32 0.0, %v968
        %v970 = vpop.f32.mrf.mxu0
        %v971 = vadd.f32 0.0, %v970
        %972 = vmatmul.bf16.gmra.mxu0 %v728
        %v973 = vpop.f32.mrf.mxu0
        %v974 = vadd.f32 0.0, %v973
        %v975 = vpop.f32.mrf.mxu0
        %v976 = vadd.f32 0.0, %v975
        %977 = vmatmul.bf16.gmra.mxu0 %v730
        %v978 = vpop.f32.mrf.mxu0
        %v979 = vadd.f32 0.0, %v978
        %v980 = vpop.f32.mrf.mxu0
        %v981 = vadd.f32 0.0, %v980
        %982 = vmatmul.bf16.gmra.mxu0 %v732
        %v983 = vpop.f32.mrf.mxu0
        %v984 = vadd.f32 0.0, %v983
        %v985 = vpop.f32.mrf.mxu0
        %v986 = vadd.f32 0.0, %v985
        %987 = vmatmul.bf16.gmra.mxu0 %v734
        %v988 = vpop.f32.mrf.mxu0
        %v989 = vadd.f32 0.0, %v988
        %v990 = vpop.f32.mrf.mxu0
        %v991 = vadd.f32 0.0, %v990
        %992 = vmatmul.bf16.gmra.mxu0 %v736
        %v993 = vpop.f32.mrf.mxu0
        %v994 = vadd.f32 0.0, %v993
        %v995 = vpop.f32.mrf.mxu0
        %v996 = vadd.f32 0.0, %v995
        %997 = vmatmul.bf16.gmra.mxu0 %v738
        %v998 = vpop.f32.mrf.mxu0
        %v999 = vadd.f32 0.0, %v998
        %v1000 = vpop.f32.mrf.mxu0
        %v1001 = vadd.f32 0.0, %v1000
        %1002 = vmatmul.bf16.gmra.mxu0 %v740
        %v1003 = vpop.f32.mrf.mxu0
        %v1004 = vadd.f32 0.0, %v1003
        %v1005 = vpop.f32.mrf.mxu0
        %v1006 = vadd.f32 0.0, %v1005
        %1007 = vmatmul.bf16.gmra.mxu0 %v742
        %v1008 = vpop.f32.mrf.mxu0
        %v1009 = vadd.f32 0.0, %v1008
        %v1010 = vpop.f32.mrf.mxu0
        %v1011 = vadd.f32 0.0, %v1010
        %1012 = vmatmul.bf16.gmra.mxu0 %v744
        %v1013 = vpop.f32.mrf.mxu0
        %v1014 = vadd.f32 0.0, %v1013
        %v1015 = vpop.f32.mrf.mxu0
        %v1016 = vadd.f32 0.0, %v1015
        %1017 = vmatmul.bf16.gmra.mxu0 %v746
        %v1018 = vpop.f32.mrf.mxu0
        %v1019 = vadd.f32 0.0, %v1018
        %v1020 = vpop.f32.mrf.mxu0
        %v1021 = vadd.f32 0.0, %v1020
        %1022 = vmatmul.bf16.gmra.mxu0 %v748
        %v1023 = vpop.f32.mrf.mxu0
        %v1024 = vadd.f32 0.0, %v1023
        %v1025 = vpop.f32.mrf.mxu0
        %v1026 = vadd.f32 0.0, %v1025
        %1027 = vmatmul.bf16.gmra.mxu0 %v750
        %v1028 = vpop.f32.mrf.mxu0
        %v1029 = vadd.f32 0.0, %v1028
        %v1030 = vpop.f32.mrf.mxu0
        %v1031 = vadd.f32 0.0, %v1030
        %1032 = vmatmul.bf16.gmra.mxu0 %v752
        %v1033 = vpop.f32.mrf.mxu0
        %v1034 = vadd.f32 0.0, %v1033
        %v1035 = vpop.f32.mrf.mxu0
        %v1036 = vadd.f32 0.0, %v1035
        %1037 = vmatmul.bf16.gmra.mxu0 %v754
        %v1038 = vpop.f32.mrf.mxu0
        %v1039 = vadd.f32 0.0, %v1038
        %v1040 = vpop.f32.mrf.mxu0
        %v1041 = vadd.f32 0.0, %v1040
        %1042 = vmatmul.bf16.gmra.mxu0 %v756
        %v1043 = vpop.f32.mrf.mxu0
        %v1044 = vadd.f32 0.0, %v1043
        %v1045 = vpop.f32.mrf.mxu0
        %v1046 = vadd.f32 0.0, %v1045
        %1047 = vmatmul.bf16.gmra.mxu0 %v758
        %v1048 = vpop.f32.mrf.mxu0
        %v1049 = vadd.f32 0.0, %v1048
        %v1050 = vpop.f32.mrf.mxu0
        %v1051 = vadd.f32 0.0, %v1050
        %1052 = vmatmul.bf16.gmra.mxu0 %v760
        %v1053 = vpop.f32.mrf.mxu0
        %v1054 = vadd.f32 0.0, %v1053
        %v1055 = vpop.f32.mrf.mxu0
        %v1056 = vadd.f32 0.0, %v1055
        %1057 = vmatmul.bf16.gmra.mxu0 %v762
        %v1058 = vpop.f32.mrf.mxu0
        %v1059 = vadd.f32 0.0, %v1058
        %v1060 = vpop.f32.mrf.mxu0
        %v1061 = vadd.f32 0.0, %v1060
        %1062 = vmatmul.bf16.gmra.mxu0 %v764
        %v1063 = vpop.f32.mrf.mxu0
        %v1064 = vadd.f32 0.0, %v1063
        %v1065 = vpop.f32.mrf.mxu0
        %v1066 = vadd.f32 0.0, %v1065
        %1067 = vmatmul.bf16.gmra.mxu0 %v766
        %v1068 = vpop.f32.mrf.mxu0
        %v1069 = vadd.f32 0.0, %v1068
        %v1070 = vpop.f32.mrf.mxu0
        %v1071 = vadd.f32 0.0, %v1070
        %1072 = vmatmul.bf16.gmra.mxu0 %v768
        %v1073 = vpop.f32.mrf.mxu0
        %v1074 = vadd.f32 0.0, %v1073
        %v1075 = vpop.f32.mrf.mxu0
        %v1076 = vadd.f32 0.0, %v1075
        %1077 = vmatmul.bf16.gmra.mxu0 %v770
        %v1078 = vpop.f32.mrf.mxu0
        %v1079 = vadd.f32 0.0, %v1078
        %v1080 = vpop.f32.mrf.mxu0
        %v1081 = vadd.f32 0.0, %v1080
        %1082 = vmatmul.bf16.gmra.mxu0 %v772
        %v1083 = vpop.f32.mrf.mxu0
        %v1084 = vadd.f32 0.0, %v1083
        %v1085 = vpop.f32.mrf.mxu0
        %v1086 = vadd.f32 0.0, %v1085
        %1087 = vmatmul.bf16.gmra.mxu0 %v774
        %v1088 = vpop.f32.mrf.mxu0
        %v1089 = vadd.f32 0.0, %v1088
        %v1090 = vpop.f32.mrf.mxu0
        %v1091 = vadd.f32 0.0, %v1090
        %1092 = vmatmul.bf16.gmra.mxu0 %v776
        %v1093 = vpop.f32.mrf.mxu0
        %v1094 = vadd.f32 0.0, %v1093
        %v1095 = vpop.f32.mrf.mxu0
        %v1096 = vadd.f32 0.0, %v1095
        %1097 = vmatmul.bf16.gmra.mxu0 %v778
        %v1098 = vpop.f32.mrf.mxu0
        %v1099 = vadd.f32 0.0, %v1098
        %v1100 = vpop.f32.mrf.mxu0
        %v1101 = vadd.f32 0.0, %v1100
        %1102 = vmatmul.bf16.gmra.mxu0 %v780
        %v1103 = vpop.f32.mrf.mxu0
        %v1104 = vadd.f32 0.0, %v1103
        %v1105 = vpop.f32.mrf.mxu0
        %v1106 = vadd.f32 0.0, %v1105
        %1107 = vmatmul.bf16.gmra.mxu0 %v782
        %v1108 = vpop.f32.mrf.mxu0
        %v1109 = vadd.f32 0.0, %v1108
        %v1110 = vpop.f32.mrf.mxu0
        %v1111 = vadd.f32 0.0, %v1110
        %1112 = vdwg.mxu0
        %1113 = vmatpush.bf16.msra.mxu0 %v927
        %1114 = vmatpush.bf16.msra.mxu0 %v926
        %1115 = vmatpush.bf16.msra.mxu0 %v925
        %1116 = vmatpush.bf16.msra.mxu0 %v924
        %1117 = vmatpush.bf16.msra.mxu0 %v923
        %1118 = vmatpush.bf16.msra.mxu0 %v922
        %1119 = vmatpush.bf16.msra.mxu0 %v921
        %1120 = vmatpush.bf16.msra.mxu0 %v920
        %1121 = vmatmul.bf16.gmra.mxu0 %v721
        %v1122 = vpop.f32.mrf.mxu0
        %v1123 = vadd.f32 %v954, %v1122
        %v1124 = vpop.f32.mrf.mxu0
        %v1125 = vadd.f32 %v956, %v1124
        %1126 = vmatmul.bf16.gmra.mxu0 %v723
        %v1127 = vpop.f32.mrf.mxu0
        %v1128 = vadd.f32 %v959, %v1127
        %v1129 = vpop.f32.mrf.mxu0
        %v1130 = vadd.f32 %v961, %v1129
        %1131 = vmatmul.bf16.gmra.mxu0 %v725
        %v1132 = vpop.f32.mrf.mxu0
        %v1133 = vadd.f32 %v964, %v1132
        %v1134 = vpop.f32.mrf.mxu0
        %v1135 = vadd.f32 %v966, %v1134
        %1136 = vmatmul.bf16.gmra.mxu0 %v727
        %v1137 = vpop.f32.mrf.mxu0
        %v1138 = vadd.f32 %v969, %v1137
        %v1139 = vpop.f32.mrf.mxu0
        %v1140 = vadd.f32 %v971, %v1139
        %1141 = vmatmul.bf16.gmra.mxu0 %v729
        %v1142 = vpop.f32.mrf.mxu0
        %v1143 = vadd.f32 %v974, %v1142
        %v1144 = vpop.f32.mrf.mxu0
        %v1145 = vadd.f32 %v976, %v1144
        %1146 = vmatmul.bf16.gmra.mxu0 %v731
        %v1147 = vpop.f32.mrf.mxu0
        %v1148 = vadd.f32 %v979, %v1147
        %v1149 = vpop.f32.mrf.mxu0
        %v1150 = vadd.f32 %v981, %v1149
        %1151 = vmatmul.bf16.gmra.mxu0 %v733
        %v1152 = vpop.f32.mrf.mxu0
        %v1153 = vadd.f32 %v984, %v1152
        %v1154 = vpop.f32.mrf.mxu0
        %v1155 = vadd.f32 %v986, %v1154
        %1156 = vmatmul.bf16.gmra.mxu0 %v735
        %v1157 = vpop.f32.mrf.mxu0
        %v1158 = vadd.f32 %v989, %v1157
        %v1159 = vpop.f32.mrf.mxu0
        %v1160 = vadd.f32 %v991, %v1159
        %1161 = vmatmul.bf16.gmra.mxu0 %v737
        %v1162 = vpop.f32.mrf.mxu0
        %v1163 = vadd.f32 %v994, %v1162
        %v1164 = vpop.f32.mrf.mxu0
        %v1165 = vadd.f32 %v996, %v1164
        %1166 = vmatmul.bf16.gmra.mxu0 %v739
        %v1167 = vpop.f32.mrf.mxu0
        %v1168 = vadd.f32 %v999, %v1167
        %v1169 = vpop.f32.mrf.mxu0
        %v1170 = vadd.f32 %v1001, %v1169
        %1171 = vmatmul.bf16.gmra.mxu0 %v741
        %v1172 = vpop.f32.mrf.mxu0
        %v1173 = vadd.f32 %v1004, %v1172
        %v1174 = vpop.f32.mrf.mxu0
        %v1175 = vadd.f32 %v1006, %v1174
        %1176 = vmatmul.bf16.gmra.mxu0 %v743
        %v1177 = vpop.f32.mrf.mxu0
        %v1178 = vadd.f32 %v1009, %v1177
        %v1179 = vpop.f32.mrf.mxu0
        %v1180 = vadd.f32 %v1011, %v1179
        %1181 = vmatmul.bf16.gmra.mxu0 %v745
        %v1182 = vpop.f32.mrf.mxu0
        %v1183 = vadd.f32 %v1014, %v1182
        %v1184 = vpop.f32.mrf.mxu0
        %v1185 = vadd.f32 %v1016, %v1184
        %1186 = vmatmul.bf16.gmra.mxu0 %v747
        %v1187 = vpop.f32.mrf.mxu0
        %v1188 = vadd.f32 %v1019, %v1187
        %v1189 = vpop.f32.mrf.mxu0
        %v1190 = vadd.f32 %v1021, %v1189
        %1191 = vmatmul.bf16.gmra.mxu0 %v749
        %v1192 = vpop.f32.mrf.mxu0
        %v1193 = vadd.f32 %v1024, %v1192
        %v1194 = vpop.f32.mrf.mxu0
        %v1195 = vadd.f32 %v1026, %v1194
        %1196 = vmatmul.bf16.gmra.mxu0 %v751
        %v1197 = vpop.f32.mrf.mxu0
        %v1198 = vadd.f32 %v1029, %v1197
        %v1199 = vpop.f32.mrf.mxu0
        %v1200 = vadd.f32 %v1031, %v1199
        %1201 = vmatmul.bf16.gmra.mxu0 %v753
        %v1202 = vpop.f32.mrf.mxu0
        %v1203 = vadd.f32 %v1034, %v1202
        %v1204 = vpop.f32.mrf.mxu0
        %v1205 = vadd.f32 %v1036, %v1204
        %1206 = vmatmul.bf16.gmra.mxu0 %v755
        %v1207 = vpop.f32.mrf.mxu0
        %v1208 = vadd.f32 %v1039, %v1207
        %v1209 = vpop.f32.mrf.mxu0
        %v1210 = vadd.f32 %v1041, %v1209
        %1211 = vmatmul.bf16.gmra.mxu0 %v757
        %v1212 = vpop.f32.mrf.mxu0
        %v1213 = vadd.f32 %v1044, %v1212
        %v1214 = vpop.f32.mrf.mxu0
        %v1215 = vadd.f32 %v1046, %v1214
        %1216 = vmatmul.bf16.gmra.mxu0 %v759
        %v1217 = vpop.f32.mrf.mxu0
        %v1218 = vadd.f32 %v1049, %v1217
        %v1219 = vpop.f32.mrf.mxu0
        %v1220 = vadd.f32 %v1051, %v1219
        %1221 = vmatmul.bf16.gmra.mxu0 %v761
        %v1222 = vpop.f32.mrf.mxu0
        %v1223 = vadd.f32 %v1054, %v1222
        %v1224 = vpop.f32.mrf.mxu0
        %v1225 = vadd.f32 %v1056, %v1224
        %1226 = vmatmul.bf16.gmra.mxu0 %v763
        %v1227 = vpop.f32.mrf.mxu0
        %v1228 = vadd.f32 %v1059, %v1227
        %v1229 = vpop.f32.mrf.mxu0
        %v1230 = vadd.f32 %v1061, %v1229
        %1231 = vmatmul.bf16.gmra.mxu0 %v765
        %v1232 = vpop.f32.mrf.mxu0
        %v1233 = vadd.f32 %v1064, %v1232
        %v1234 = vpop.f32.mrf.mxu0
        %v1235 = vadd.f32 %v1066, %v1234
        %1236 = vmatmul.bf16.gmra.mxu0 %v767
        %v1237 = vpop.f32.mrf.mxu0
        %v1238 = vadd.f32 %v1069, %v1237
        %v1239 = vpop.f32.mrf.mxu0
        %v1240 = vadd.f32 %v1071, %v1239
        %1241 = vmatmul.bf16.gmra.mxu0 %v769
        %v1242 = vpop.f32.mrf.mxu0
        %v1243 = vadd.f32 %v1074, %v1242
        %v1244 = vpop.f32.mrf.mxu0
        %v1245 = vadd.f32 %v1076, %v1244
        %1246 = vmatmul.bf16.gmra.mxu0 %v771
        %v1247 = vpop.f32.mrf.mxu0
        %v1248 = vadd.f32 %v1079, %v1247
        %v1249 = vpop.f32.mrf.mxu0
        %v1250 = vadd.f32 %v1081, %v1249
        %1251 = vmatmul.bf16.gmra.mxu0 %v773
        %v1252 = vpop.f32.mrf.mxu0
        %v1253 = vadd.f32 %v1084, %v1252
        %v1254 = vpop.f32.mrf.mxu0
        %v1255 = vadd.f32 %v1086, %v1254
        %1256 = vmatmul.bf16.gmra.mxu0 %v775
        %v1257 = vpop.f32.mrf.mxu0
        %v1258 = vadd.f32 %v1089, %v1257
        %v1259 = vpop.f32.mrf.mxu0
        %v1260 = vadd.f32 %v1091, %v1259
        %1261 = vmatmul.bf16.gmra.mxu0 %v777
        %v1262 = vpop.f32.mrf.mxu0
        %v1263 = vadd.f32 %v1094, %v1262
        %v1264 = vpop.f32.mrf.mxu0
        %v1265 = vadd.f32 %v1096, %v1264
        %1266 = vmatmul.bf16.gmra.mxu0 %v779
        %v1267 = vpop.f32.mrf.mxu0
        %v1268 = vadd.f32 %v1099, %v1267
        %v1269 = vpop.f32.mrf.mxu0
        %v1270 = vadd.f32 %v1101, %v1269
        %1271 = vmatmul.bf16.gmra.mxu0 %v781
        %v1272 = vpop.f32.mrf.mxu0
        %v1273 = vadd.f32 %v1104, %v1272
        %v1274 = vpop.f32.mrf.mxu0
        %v1275 = vadd.f32 %v1106, %v1274
        %1276 = vmatmul.bf16.gmra.mxu0 %v783
        %v1277 = vpop.f32.mrf.mxu0
        %v1278 = vadd.f32 %v1109, %v1277
        %v1279 = vpop.f32.mrf.mxu0
        %v1280 = vadd.f32 %v1111, %v1279
        %1281 = vdwg.mxu0
        %v1282 = vadd.f32 %v368, %v1123
        %v1283 = vadd.f32 %v369, %v1125
        %v1284 = vadd.f32 %v370, %v1128
        %v1285 = vadd.f32 %v371, %v1130
        %v1286 = vadd.f32 %v372, %v1133
        %v1287 = vadd.f32 %v373, %v1135
        %v1288 = vadd.f32 %v374, %v1138
        %v1289 = vadd.f32 %v375, %v1140
        %v1290 = vadd.f32 %v376, %v1143
        %v1291 = vadd.f32 %v377, %v1145
        %v1292 = vadd.f32 %v378, %v1148
        %v1293 = vadd.f32 %v379, %v1150
        %v1294 = vadd.f32 %v380, %v1153
        %v1295 = vadd.f32 %v381, %v1155
        %v1296 = vadd.f32 %v382, %v1158
        %v1297 = vadd.f32 %v383, %v1160
        %v1298 = vadd.f32 %v384, %v1163
        %v1299 = vadd.f32 %v385, %v1165
        %v1300 = vadd.f32 %v386, %v1168
        %v1301 = vadd.f32 %v387, %v1170
        %v1302 = vadd.f32 %v388, %v1173
        %v1303 = vadd.f32 %v389, %v1175
        %v1304 = vadd.f32 %v390, %v1178
        %v1305 = vadd.f32 %v391, %v1180
        %v1306 = vadd.f32 %v392, %v1183
        %v1307 = vadd.f32 %v393, %v1185
        %v1308 = vadd.f32 %v394, %v1188
        %v1309 = vadd.f32 %v395, %v1190
        %v1310 = vadd.f32 %v396, %v1193
        %v1311 = vadd.f32 %v397, %v1195
        %v1312 = vadd.f32 %v398, %v1198
        %v1313 = vadd.f32 %v399, %v1200
        %v1314 = vadd.f32 %v400, %v1203
        %v1315 = vadd.f32 %v401, %v1205
        %v1316 = vadd.f32 %v402, %v1208
        %v1317 = vadd.f32 %v403, %v1210
        %v1318 = vadd.f32 %v404, %v1213
        %v1319 = vadd.f32 %v405, %v1215
        %v1320 = vadd.f32 %v406, %v1218
        %v1321 = vadd.f32 %v407, %v1220
        %v1322 = vadd.f32 %v408, %v1223
        %v1323 = vadd.f32 %v409, %v1225
        %v1324 = vadd.f32 %v410, %v1228
        %v1325 = vadd.f32 %v411, %v1230
        %v1326 = vadd.f32 %v412, %v1233
        %v1327 = vadd.f32 %v413, %v1235
        %v1328 = vadd.f32 %v414, %v1238
        %v1329 = vadd.f32 %v415, %v1240
        %v1330 = vadd.f32 %v416, %v1243
        %v1331 = vadd.f32 %v417, %v1245
        %v1332 = vadd.f32 %v418, %v1248
        %v1333 = vadd.f32 %v419, %v1250
        %v1334 = vadd.f32 %v420, %v1253
        %v1335 = vadd.f32 %v421, %v1255
        %v1336 = vadd.f32 %v422, %v1258
        %v1337 = vadd.f32 %v423, %v1260
        %v1338 = vadd.f32 %v424, %v1263
        %v1339 = vadd.f32 %v425, %v1265
        %v1340 = vadd.f32 %v426, %v1268
        %v1341 = vadd.f32 %v427, %v1270
        %v1342 = vadd.f32 %v428, %v1273
        %v1343 = vadd.f32 %v429, %v1275
        %v1344 = vadd.f32 %v430, %v1278
        %v1345 = vadd.f32 %v431, %v1280
        %1346 = vst [vmem:[#allocation2] sm:$0xff] %v1282
        %1347 = vst [vmem:[#allocation2 + $0x8] sm:$0xff] %v1283
        %1348 = vst [vmem:[#allocation2 + $0x10] sm:$0xff] %v1284
        %1349 = vst [vmem:[#allocation2 + $0x18] sm:$0xff] %v1285
        %1350 = vst [vmem:[#allocation2 + $0x20] sm:$0xff] %v1286
        %1351 = vst [vmem:[#allocation2 + $0x28] sm:$0xff] %v1287
        %1352 = vst [vmem:[#allocation2 + $0x30] sm:$0xff] %v1288
        %1353 = vst [vmem:[#allocation2 + $0x38] sm:$0xff] %v1289
        %1354 = vst [vmem:[#allocation2 + $0x40] sm:$0xff] %v1290
        %1355 = vst [vmem:[#allocation2 + $0x48] sm:$0xff] %v1291
        %1356 = vst [vmem:[#allocation2 + $0x50] sm:$0xff] %v1292
        %1357 = vst [vmem:[#allocation2 + $0x58] sm:$0xff] %v1293
        %1358 = vst [vmem:[#allocation2 + $0x60] sm:$0xff] %v1294
        %1359 = vst [vmem:[#allocation2 + $0x68] sm:$0xff] %v1295
        %1360 = vst [vmem:[#allocation2 + $0x70] sm:$0xff] %v1296
        %1361 = vst [vmem:[#allocation2 + $0x78] sm:$0xff] %v1297
        %1362 = vst [vmem:[#allocation2 + $0x80] sm:$0xff] %v1298
        %1363 = vst [vmem:[#allocation2 + $0x88] sm:$0xff] %v1299
        %1364 = vst [vmem:[#allocation2 + $0x90] sm:$0xff] %v1300
        %1365 = vst [vmem:[#allocation2 + $0x98] sm:$0xff] %v1301
        %1366 = vst [vmem:[#allocation2 + $0xa0] sm:$0xff] %v1302
        %1367 = vst [vmem:[#allocation2 + $0xa8] sm:$0xff] %v1303
        %1368 = vst [vmem:[#allocation2 + $0xb0] sm:$0xff] %v1304
        %1369 = vst [vmem:[#allocation2 + $0xb8] sm:$0xff] %v1305
        %1370 = vst [vmem:[#allocation2 + $0xc0] sm:$0xff] %v1306
        %1371 = vst [vmem:[#allocation2 + $0xc8] sm:$0xff] %v1307
        %1372 = vst [vmem:[#allocation2 + $0xd0] sm:$0xff] %v1308
        %1373 = vst [vmem:[#allocation2 + $0xd8] sm:$0xff] %v1309
        %1374 = vst [vmem:[#allocation2 + $0xe0] sm:$0xff] %v1310
        %1375 = vst [vmem:[#allocation2 + $0xe8] sm:$0xff] %v1311
        %1376 = vst [vmem:[#allocation2 + $0xf0] sm:$0xff] %v1312
        %1377 = vst [vmem:[#allocation2 + $0xf8] sm:$0xff] %v1313
        %1378 = vst [vmem:[#allocation2 + $0x100] sm:$0xff] %v1314
        %1379 = vst [vmem:[#allocation2 + $0x108] sm:$0xff] %v1315
        %1380 = vst [vmem:[#allocation2 + $0x110] sm:$0xff] %v1316
        %1381 = vst [vmem:[#allocation2 + $0x118] sm:$0xff] %v1317
        %1382 = vst [vmem:[#allocation2 + $0x120] sm:$0xff] %v1318
        %1383 = vst [vmem:[#allocation2 + $0x128] sm:$0xff] %v1319
        %1384 = vst [vmem:[#allocation2 + $0x130] sm:$0xff] %v1320
        %1385 = vst [vmem:[#allocation2 + $0x138] sm:$0xff] %v1321
        %1386 = vst [vmem:[#allocation2 + $0x140] sm:$0xff] %v1322
        %1387 = vst [vmem:[#allocation2 + $0x148] sm:$0xff] %v1323
        %1388 = vst [vmem:[#allocation2 + $0x150] sm:$0xff] %v1324
        %1389 = vst [vmem:[#allocation2 + $0x158] sm:$0xff] %v1325
        %1390 = vst [vmem:[#allocation2 + $0x160] sm:$0xff] %v1326
        %1391 = vst [vmem:[#allocation2 + $0x168] sm:$0xff] %v1327
        %1392 = vst [vmem:[#allocation2 + $0x170] sm:$0xff] %v1328
        %1393 = vst [vmem:[#allocation2 + $0x178] sm:$0xff] %v1329
        %1394 = vst [vmem:[#allocation2 + $0x180] sm:$0xff] %v1330
        %1395 = vst [vmem:[#allocation2 + $0x188] sm:$0xff] %v1331
        %1396 = vst [vmem:[#allocation2 + $0x190] sm:$0xff] %v1332
        %1397 = vst [vmem:[#allocation2 + $0x198] sm:$0xff] %v1333
        %1398 = vst [vmem:[#allocation2 + $0x1a0] sm:$0xff] %v1334
        %1399 = vst [vmem:[#allocation2 + $0x1a8] sm:$0xff] %v1335
        %1400 = vst [vmem:[#allocation2 + $0x1b0] sm:$0xff] %v1336
        %1401 = vst [vmem:[#allocation2 + $0x1b8] sm:$0xff] %v1337
        %1402 = vst [vmem:[#allocation2 + $0x1c0] sm:$0xff] %v1338
        %1403 = vst [vmem:[#allocation2 + $0x1c8] sm:$0xff] %v1339
        %1404 = vst [vmem:[#allocation2 + $0x1d0] sm:$0xff] %v1340
        %1405 = vst [vmem:[#allocation2 + $0x1d8] sm:$0xff] %v1341
        %1406 = vst [vmem:[#allocation2 + $0x1e0] sm:$0xff] %v1342
        %1407 = vst [vmem:[#allocation2 + $0x1e8] sm:$0xff] %v1343
        %1408 = vst [vmem:[#allocation2 + $0x1f0] sm:$0xff] %v1344
        %1409 = vst [vmem:[#allocation2 + $0x1f8] sm:$0xff] %v1345
        // Predicated region
        $region41: #{_conv2d_impl.1} parent=35 // pred_check
          %p1410 = pneg %p300
        $region42: #{_conv2d_impl.1} parent=35 // pred_check_branch
          %1412 = sbr.rel (%p1410) target = $region44
        $region43: #{_conv2d_impl.1} parent=35 // pred_region
          %v1413 = vld [vmem:[#allocation2] sm:$0xff]
          %v1414 = vld [vmem:[#allocation2 + $0x8] sm:$0xff]
          %v1415 = vld [vmem:[#allocation2 + $0x10] sm:$0xff]
          %v1416 = vld [vmem:[#allocation2 + $0x18] sm:$0xff]
          %v1417 = vld [vmem:[#allocation2 + $0x20] sm:$0xff]
          %v1418 = vld [vmem:[#allocation2 + $0x28] sm:$0xff]
          %v1419 = vld [vmem:[#allocation2 + $0x30] sm:$0xff]
          %v1420 = vld [vmem:[#allocation2 + $0x38] sm:$0xff]
          %v1421 = vld [vmem:[#allocation2 + $0x40] sm:$0xff]
          %v1422 = vld [vmem:[#allocation2 + $0x48] sm:$0xff]
          %v1423 = vld [vmem:[#allocation2 + $0x50] sm:$0xff]
          %v1424 = vld [vmem:[#allocation2 + $0x58] sm:$0xff]
          %v1425 = vld [vmem:[#allocation2 + $0x60] sm:$0xff]
          %v1426 = vld [vmem:[#allocation2 + $0x68] sm:$0xff]
          %v1427 = vld [vmem:[#allocation2 + $0x70] sm:$0xff]
          %v1428 = vld [vmem:[#allocation2 + $0x78] sm:$0xff]
          %v1429 = vld [vmem:[#allocation2 + $0x80] sm:$0xff]
          %v1430 = vld [vmem:[#allocation2 + $0x88] sm:$0xff]
          %v1431 = vld [vmem:[#allocation2 + $0x90] sm:$0xff]
          %v1432 = vld [vmem:[#allocation2 + $0x98] sm:$0xff]
          %v1433 = vld [vmem:[#allocation2 + $0xa0] sm:$0xff]
          %v1434 = vld [vmem:[#allocation2 + $0xa8] sm:$0xff]
          %v1435 = vld [vmem:[#allocation2 + $0xb0] sm:$0xff]
          %v1436 = vld [vmem:[#allocation2 + $0xb8] sm:$0xff]
          %v1437 = vld [vmem:[#allocation2 + $0xc0] sm:$0xff]
          %v1438 = vld [vmem:[#allocation2 + $0xc8] sm:$0xff]
          %v1439 = vld [vmem:[#allocation2 + $0xd0] sm:$0xff]
          %v1440 = vld [vmem:[#allocation2 + $0xd8] sm:$0xff]
          %v1441 = vld [vmem:[#allocation2 + $0xe0] sm:$0xff]
          %v1442 = vld [vmem:[#allocation2 + $0xe8] sm:$0xff]
          %v1443 = vld [vmem:[#allocation2 + $0xf0] sm:$0xff]
          %v1444 = vld [vmem:[#allocation2 + $0xf8] sm:$0xff]
          %v1445 = vld [vmem:[#allocation2 + $0x100] sm:$0xff]
          %v1446 = vld [vmem:[#allocation2 + $0x108] sm:$0xff]
          %v1447 = vld [vmem:[#allocation2 + $0x110] sm:$0xff]
          %v1448 = vld [vmem:[#allocation2 + $0x118] sm:$0xff]
          %v1449 = vld [vmem:[#allocation2 + $0x120] sm:$0xff]
          %v1450 = vld [vmem:[#allocation2 + $0x128] sm:$0xff]
          %v1451 = vld [vmem:[#allocation2 + $0x130] sm:$0xff]
          %v1452 = vld [vmem:[#allocation2 + $0x138] sm:$0xff]
          %v1453 = vld [vmem:[#allocation2 + $0x140] sm:$0xff]
          %v1454 = vld [vmem:[#allocation2 + $0x148] sm:$0xff]
          %v1455 = vld [vmem:[#allocation2 + $0x150] sm:$0xff]
          %v1456 = vld [vmem:[#allocation2 + $0x158] sm:$0xff]
          %v1457 = vld [vmem:[#allocation2 + $0x160] sm:$0xff]
          %v1458 = vld [vmem:[#allocation2 + $0x168] sm:$0xff]
          %v1459 = vld [vmem:[#allocation2 + $0x170] sm:$0xff]
          %v1460 = vld [vmem:[#allocation2 + $0x178] sm:$0xff]
          %v1461 = vld [vmem:[#allocation2 + $0x180] sm:$0xff]
          %v1462 = vld [vmem:[#allocation2 + $0x188] sm:$0xff]
          %v1463 = vld [vmem:[#allocation2 + $0x190] sm:$0xff]
          %v1464 = vld [vmem:[#allocation2 + $0x198] sm:$0xff]
          %v1465 = vld [vmem:[#allocation2 + $0x1a0] sm:$0xff]
          %v1466 = vld [vmem:[#allocation2 + $0x1a8] sm:$0xff]
          %v1467 = vld [vmem:[#allocation2 + $0x1b0] sm:$0xff]
          %v1468 = vld [vmem:[#allocation2 + $0x1b8] sm:$0xff]
          %v1469 = vld [vmem:[#allocation2 + $0x1c0] sm:$0xff]
          %v1470 = vld [vmem:[#allocation2 + $0x1c8] sm:$0xff]
          %v1471 = vld [vmem:[#allocation2 + $0x1d0] sm:$0xff]
          %v1472 = vld [vmem:[#allocation2 + $0x1d8] sm:$0xff]
          %v1473 = vld [vmem:[#allocation2 + $0x1e0] sm:$0xff]
          %v1474 = vld [vmem:[#allocation2 + $0x1e8] sm:$0xff]
          %v1475 = vld [vmem:[#allocation2 + $0x1f0] sm:$0xff]
          %v1476 = vld [vmem:[#allocation2 + $0x1f8] sm:$0xff]
          %v1477 = vld [vmem:[%s295] sm:$0x1]
          %v1479 = vperm.slane %v1477, 0
          %v1481 = vmul.f32 %v1413, %v1479
          %v1482 = vmul.f32 %v1414, %v1479
          %v1483 = vmul.f32 %v1415, %v1479
          %v1484 = vmul.f32 %v1416, %v1479
          %v1485 = vmul.f32 %v1417, %v1479
          %v1486 = vmul.f32 %v1418, %v1479
          %v1487 = vmul.f32 %v1419, %v1479
          %v1488 = vmul.f32 %v1420, %v1479
          %v1489 = vmul.f32 %v1421, %v1479
          %v1490 = vmul.f32 %v1422, %v1479
          %v1491 = vmul.f32 %v1423, %v1479
          %v1492 = vmul.f32 %v1424, %v1479
          %v1493 = vmul.f32 %v1425, %v1479
          %v1494 = vmul.f32 %v1426, %v1479
          %v1495 = vmul.f32 %v1427, %v1479
          %v1496 = vmul.f32 %v1428, %v1479
          %v1497 = vmul.f32 %v1429, %v1479
          %v1498 = vmul.f32 %v1430, %v1479
          %v1499 = vmul.f32 %v1431, %v1479
          %v1500 = vmul.f32 %v1432, %v1479
          %v1501 = vmul.f32 %v1433, %v1479
          %v1502 = vmul.f32 %v1434, %v1479
          %v1503 = vmul.f32 %v1435, %v1479
          %v1504 = vmul.f32 %v1436, %v1479
          %v1505 = vmul.f32 %v1437, %v1479
          %v1506 = vmul.f32 %v1438, %v1479
          %v1507 = vmul.f32 %v1439, %v1479
          %v1508 = vmul.f32 %v1440, %v1479
          %v1509 = vmul.f32 %v1441, %v1479
          %v1510 = vmul.f32 %v1442, %v1479
          %v1511 = vmul.f32 %v1443, %v1479
          %v1512 = vmul.f32 %v1444, %v1479
          %v1513 = vmul.f32 %v1445, %v1479
          %v1514 = vmul.f32 %v1446, %v1479
          %v1515 = vmul.f32 %v1447, %v1479
          %v1516 = vmul.f32 %v1448, %v1479
          %v1517 = vmul.f32 %v1449, %v1479
          %v1518 = vmul.f32 %v1450, %v1479
          %v1519 = vmul.f32 %v1451, %v1479
          %v1520 = vmul.f32 %v1452, %v1479
          %v1521 = vmul.f32 %v1453, %v1479
          %v1522 = vmul.f32 %v1454, %v1479
          %v1523 = vmul.f32 %v1455, %v1479
          %v1524 = vmul.f32 %v1456, %v1479
          %v1525 = vmul.f32 %v1457, %v1479
          %v1526 = vmul.f32 %v1458, %v1479
          %v1527 = vmul.f32 %v1459, %v1479
          %v1528 = vmul.f32 %v1460, %v1479
          %v1529 = vmul.f32 %v1461, %v1479
          %v1530 = vmul.f32 %v1462, %v1479
          %v1531 = vmul.f32 %v1463, %v1479
          %v1532 = vmul.f32 %v1464, %v1479
          %v1533 = vmul.f32 %v1465, %v1479
          %v1534 = vmul.f32 %v1466, %v1479
          %v1535 = vmul.f32 %v1467, %v1479
          %v1536 = vmul.f32 %v1468, %v1479
          %v1537 = vmul.f32 %v1469, %v1479
          %v1538 = vmul.f32 %v1470, %v1479
          %v1539 = vmul.f32 %v1471, %v1479
          %v1540 = vmul.f32 %v1472, %v1479
          %v1541 = vmul.f32 %v1473, %v1479
          %v1542 = vmul.f32 %v1474, %v1479
          %v1543 = vmul.f32 %v1475, %v1479
          %v1544 = vmul.f32 %v1476, %v1479
          %v1545 = vld [vmem:[%s298] sm:$0x1]
          %v1547 = vperm.slane %v1545, 0
          %v1549 = vadd.f32 %v1481, %v1547
          %v1550 = vadd.f32 %v1482, %v1547
          %v1551 = vadd.f32 %v1483, %v1547
          %v1552 = vadd.f32 %v1484, %v1547
          %v1553 = vadd.f32 %v1485, %v1547
          %v1554 = vadd.f32 %v1486, %v1547
          %v1555 = vadd.f32 %v1487, %v1547
          %v1556 = vadd.f32 %v1488, %v1547
          %v1557 = vadd.f32 %v1489, %v1547
          %v1558 = vadd.f32 %v1490, %v1547
          %v1559 = vadd.f32 %v1491, %v1547
          %v1560 = vadd.f32 %v1492, %v1547
          %v1561 = vadd.f32 %v1493, %v1547
          %v1562 = vadd.f32 %v1494, %v1547
          %v1563 = vadd.f32 %v1495, %v1547
          %v1564 = vadd.f32 %v1496, %v1547
          %v1565 = vadd.f32 %v1497, %v1547
          %v1566 = vadd.f32 %v1498, %v1547
          %v1567 = vadd.f32 %v1499, %v1547
          %v1568 = vadd.f32 %v1500, %v1547
          %v1569 = vadd.f32 %v1501, %v1547
          %v1570 = vadd.f32 %v1502, %v1547
          %v1571 = vadd.f32 %v1503, %v1547
          %v1572 = vadd.f32 %v1504, %v1547
          %v1573 = vadd.f32 %v1505, %v1547
          %v1574 = vadd.f32 %v1506, %v1547
          %v1575 = vadd.f32 %v1507, %v1547
          %v1576 = vadd.f32 %v1508, %v1547
          %v1577 = vadd.f32 %v1509, %v1547
          %v1578 = vadd.f32 %v1510, %v1547
          %v1579 = vadd.f32 %v1511, %v1547
          %v1580 = vadd.f32 %v1512, %v1547
          %v1581 = vadd.f32 %v1513, %v1547
          %v1582 = vadd.f32 %v1514, %v1547
          %v1583 = vadd.f32 %v1515, %v1547
          %v1584 = vadd.f32 %v1516, %v1547
          %v1585 = vadd.f32 %v1517, %v1547
          %v1586 = vadd.f32 %v1518, %v1547
          %v1587 = vadd.f32 %v1519, %v1547
          %v1588 = vadd.f32 %v1520, %v1547
          %v1589 = vadd.f32 %v1521, %v1547
          %v1590 = vadd.f32 %v1522, %v1547
          %v1591 = vadd.f32 %v1523, %v1547
          %v1592 = vadd.f32 %v1524, %v1547
          %v1593 = vadd.f32 %v1525, %v1547
          %v1594 = vadd.f32 %v1526, %v1547
          %v1595 = vadd.f32 %v1527, %v1547
          %v1596 = vadd.f32 %v1528, %v1547
          %v1597 = vadd.f32 %v1529, %v1547
          %v1598 = vadd.f32 %v1530, %v1547
          %v1599 = vadd.f32 %v1531, %v1547
          %v1600 = vadd.f32 %v1532, %v1547
          %v1601 = vadd.f32 %v1533, %v1547
          %v1602 = vadd.f32 %v1534, %v1547
          %v1603 = vadd.f32 %v1535, %v1547
          %v1604 = vadd.f32 %v1536, %v1547
          %v1605 = vadd.f32 %v1537, %v1547
          %v1606 = vadd.f32 %v1538, %v1547
          %v1607 = vadd.f32 %v1539, %v1547
          %v1608 = vadd.f32 %v1540, %v1547
          %v1609 = vadd.f32 %v1541, %v1547
          %v1610 = vadd.f32 %v1542, %v1547
          %v1611 = vadd.f32 %v1543, %v1547
          %v1612 = vadd.f32 %v1544, %v1547
          %v1613 = vmax.f32 %v1549, 0.0
          %v1614 = vmax.f32 %v1550, 0.0
          %v1615 = vmax.f32 %v1551, 0.0
          %v1616 = vmax.f32 %v1552, 0.0
          %v1617 = vmax.f32 %v1553, 0.0
          %v1618 = vmax.f32 %v1554, 0.0
          %v1619 = vmax.f32 %v1555, 0.0
          %v1620 = vmax.f32 %v1556, 0.0
          %v1621 = vmax.f32 %v1557, 0.0
          %v1622 = vmax.f32 %v1558, 0.0
          %v1623 = vmax.f32 %v1559, 0.0
          %v1624 = vmax.f32 %v1560, 0.0
          %v1625 = vmax.f32 %v1561, 0.0
          %v1626 = vmax.f32 %v1562, 0.0
          %v1627 = vmax.f32 %v1563, 0.0
          %v1628 = vmax.f32 %v1564, 0.0
          %v1629 = vmax.f32 %v1565, 0.0
          %v1630 = vmax.f32 %v1566, 0.0
          %v1631 = vmax.f32 %v1567, 0.0
          %v1632 = vmax.f32 %v1568, 0.0
          %v1633 = vmax.f32 %v1569, 0.0
          %v1634 = vmax.f32 %v1570, 0.0
          %v1635 = vmax.f32 %v1571, 0.0
          %v1636 = vmax.f32 %v1572, 0.0
          %v1637 = vmax.f32 %v1573, 0.0
          %v1638 = vmax.f32 %v1574, 0.0
          %v1639 = vmax.f32 %v1575, 0.0
          %v1640 = vmax.f32 %v1576, 0.0
          %v1641 = vmax.f32 %v1577, 0.0
          %v1642 = vmax.f32 %v1578, 0.0
          %v1643 = vmax.f32 %v1579, 0.0
          %v1644 = vmax.f32 %v1580, 0.0
          %v1645 = vmax.f32 %v1581, 0.0
          %v1646 = vmax.f32 %v1582, 0.0
          %v1647 = vmax.f32 %v1583, 0.0
          %v1648 = vmax.f32 %v1584, 0.0
          %v1649 = vmax.f32 %v1585, 0.0
          %v1650 = vmax.f32 %v1586, 0.0
          %v1651 = vmax.f32 %v1587, 0.0
          %v1652 = vmax.f32 %v1588, 0.0
          %v1653 = vmax.f32 %v1589, 0.0
          %v1654 = vmax.f32 %v1590, 0.0
          %v1655 = vmax.f32 %v1591, 0.0
          %v1656 = vmax.f32 %v1592, 0.0
          %v1657 = vmax.f32 %v1593, 0.0
          %v1658 = vmax.f32 %v1594, 0.0
          %v1659 = vmax.f32 %v1595, 0.0
          %v1660 = vmax.f32 %v1596, 0.0
          %v1661 = vmax.f32 %v1597, 0.0
          %v1662 = vmax.f32 %v1598, 0.0
          %v1663 = vmax.f32 %v1599, 0.0
          %v1664 = vmax.f32 %v1600, 0.0
          %v1665 = vmax.f32 %v1601, 0.0
          %v1666 = vmax.f32 %v1602, 0.0
          %v1667 = vmax.f32 %v1603, 0.0
          %v1668 = vmax.f32 %v1604, 0.0
          %v1669 = vmax.f32 %v1605, 0.0
          %v1670 = vmax.f32 %v1606, 0.0
          %v1671 = vmax.f32 %v1607, 0.0
          %v1672 = vmax.f32 %v1608, 0.0
          %v1673 = vmax.f32 %v1609, 0.0
          %v1674 = vmax.f32 %v1610, 0.0
          %v1675 = vmax.f32 %v1611, 0.0
          %v1676 = vmax.f32 %v1612, 0.0
          %v1677 = vpack.c.bf16 %v1613, %v1613
          %v1678 = vpack.c.bf16 %v1614, %v1614
          %v1679 = vpack.c.bf16 %v1615, %v1615
          %v1680 = vpack.c.bf16 %v1616, %v1616
          %v1681 = vpack.c.bf16 %v1617, %v1617
          %v1682 = vpack.c.bf16 %v1618, %v1618
          %v1683 = vpack.c.bf16 %v1619, %v1619
          %v1684 = vpack.c.bf16 %v1620, %v1620
          %v1685 = vpack.c.bf16 %v1621, %v1621
          %v1686 = vpack.c.bf16 %v1622, %v1622
          %v1687 = vpack.c.bf16 %v1623, %v1623
          %v1688 = vpack.c.bf16 %v1624, %v1624
          %v1689 = vpack.c.bf16 %v1625, %v1625
          %v1690 = vpack.c.bf16 %v1626, %v1626
          %v1691 = vpack.c.bf16 %v1627, %v1627
          %v1692 = vpack.c.bf16 %v1628, %v1628
          %v1693 = vpack.c.bf16 %v1629, %v1629
          %v1694 = vpack.c.bf16 %v1630, %v1630
          %v1695 = vpack.c.bf16 %v1631, %v1631
          %v1696 = vpack.c.bf16 %v1632, %v1632
          %v1697 = vpack.c.bf16 %v1633, %v1633
          %v1698 = vpack.c.bf16 %v1634, %v1634
          %v1699 = vpack.c.bf16 %v1635, %v1635
          %v1700 = vpack.c.bf16 %v1636, %v1636
          %v1701 = vpack.c.bf16 %v1637, %v1637
          %v1702 = vpack.c.bf16 %v1638, %v1638
          %v1703 = vpack.c.bf16 %v1639, %v1639
          %v1704 = vpack.c.bf16 %v1640, %v1640
          %v1705 = vpack.c.bf16 %v1641, %v1641
          %v1706 = vpack.c.bf16 %v1642, %v1642
          %v1707 = vpack.c.bf16 %v1643, %v1643
          %v1708 = vpack.c.bf16 %v1644, %v1644
          %v1709 = vpack.c.bf16 %v1645, %v1645
          %v1710 = vpack.c.bf16 %v1646, %v1646
          %v1711 = vpack.c.bf16 %v1647, %v1647
          %v1712 = vpack.c.bf16 %v1648, %v1648
          %v1713 = vpack.c.bf16 %v1649, %v1649
          %v1714 = vpack.c.bf16 %v1650, %v1650
          %v1715 = vpack.c.bf16 %v1651, %v1651
          %v1716 = vpack.c.bf16 %v1652, %v1652
          %v1717 = vpack.c.bf16 %v1653, %v1653
          %v1718 = vpack.c.bf16 %v1654, %v1654
          %v1719 = vpack.c.bf16 %v1655, %v1655
          %v1720 = vpack.c.bf16 %v1656, %v1656
          %v1721 = vpack.c.bf16 %v1657, %v1657
          %v1722 = vpack.c.bf16 %v1658, %v1658
          %v1723 = vpack.c.bf16 %v1659, %v1659
          %v1724 = vpack.c.bf16 %v1660, %v1660
          %v1725 = vpack.c.bf16 %v1661, %v1661
          %v1726 = vpack.c.bf16 %v1662, %v1662
          %v1727 = vpack.c.bf16 %v1663, %v1663
          %v1728 = vpack.c.bf16 %v1664, %v1664
          %v1729 = vpack.c.bf16 %v1665, %v1665
          %v1730 = vpack.c.bf16 %v1666, %v1666
          %v1731 = vpack.c.bf16 %v1667, %v1667
          %v1732 = vpack.c.bf16 %v1668, %v1668
          %v1733 = vpack.c.bf16 %v1669, %v1669
          %v1734 = vpack.c.bf16 %v1670, %v1670
          %v1735 = vpack.c.bf16 %v1671, %v1671
          %v1736 = vpack.c.bf16 %v1672, %v1672
          %v1737 = vpack.c.bf16 %v1673, %v1673
          %v1738 = vpack.c.bf16 %v1674, %v1674
          %v1739 = vpack.c.bf16 %v1675, %v1675
          %v1740 = vpack.c.bf16 %v1676, %v1676
          %1741 = vst [vmem:[%s271] sm:$0xf] %v1677
          %1742 = vst [vmem:[%s271 + $0x4] sm:$0xf] %v1678
          %1743 = vst [vmem:[%s271 + $0x8] sm:$0xf] %v1679
          %1744 = vst [vmem:[%s271 + $0xc] sm:$0xf] %v1680
          %1745 = vst [vmem:[%s271 + $0x10] sm:$0xf] %v1681
          %1746 = vst [vmem:[%s271 + $0x14] sm:$0xf] %v1682
          %1747 = vst [vmem:[%s271 + $0x18] sm:$0xf] %v1683
          %1748 = vst [vmem:[%s271 + $0x1c] sm:$0xf] %v1684
          %1749 = vst [vmem:[%s271 + $0x20] sm:$0xf] %v1685
          %1750 = vst [vmem:[%s271 + $0x24] sm:$0xf] %v1686
          %1751 = vst [vmem:[%s271 + $0x28] sm:$0xf] %v1687
          %1752 = vst [vmem:[%s271 + $0x2c] sm:$0xf] %v1688
          %1753 = vst [vmem:[%s271 + $0x30] sm:$0xf] %v1689
          %1754 = vst [vmem:[%s271 + $0x34] sm:$0xf] %v1690
          %1755 = vst [vmem:[%s271 + $0x38] sm:$0xf] %v1691
          %1756 = vst [vmem:[%s271 + $0x3c] sm:$0xf] %v1692
          %1757 = vst [vmem:[%s271 + $0x40] sm:$0xf] %v1693
          %1758 = vst [vmem:[%s271 + $0x44] sm:$0xf] %v1694
          %1759 = vst [vmem:[%s271 + $0x48] sm:$0xf] %v1695
          %1760 = vst [vmem:[%s271 + $0x4c] sm:$0xf] %v1696
          %1761 = vst [vmem:[%s271 + $0x50] sm:$0xf] %v1697
          %1762 = vst [vmem:[%s271 + $0x54] sm:$0xf] %v1698
          %1763 = vst [vmem:[%s271 + $0x58] sm:$0xf] %v1699
          %1764 = vst [vmem:[%s271 + $0x5c] sm:$0xf] %v1700
          %1765 = vst [vmem:[%s271 + $0x60] sm:$0xf] %v1701
          %1766 = vst [vmem:[%s271 + $0x64] sm:$0xf] %v1702
          %1767 = vst [vmem:[%s271 + $0x68] sm:$0xf] %v1703
          %1768 = vst [vmem:[%s271 + $0x6c] sm:$0xf] %v1704
          %1769 = vst [vmem:[%s271 + $0x70] sm:$0xf] %v1705
          %1770 = vst [vmem:[%s271 + $0x74] sm:$0xf] %v1706
          %1771 = vst [vmem:[%s271 + $0x78] sm:$0xf] %v1707
          %1772 = vst [vmem:[%s271 + $0x7c] sm:$0xf] %v1708
          %1773 = vst [vmem:[%s271 + $0x80] sm:$0xf] %v1709
          %1774 = vst [vmem:[%s271 + $0x84] sm:$0xf] %v1710
          %1775 = vst [vmem:[%s271 + $0x88] sm:$0xf] %v1711
          %1776 = vst [vmem:[%s271 + $0x8c] sm:$0xf] %v1712
          %1777 = vst [vmem:[%s271 + $0x90] sm:$0xf] %v1713
          %1778 = vst [vmem:[%s271 + $0x94] sm:$0xf] %v1714
          %1779 = vst [vmem:[%s271 + $0x98] sm:$0xf] %v1715
          %1780 = vst [vmem:[%s271 + $0x9c] sm:$0xf] %v1716
          %1781 = vst [vmem:[%s271 + $0xa0] sm:$0xf] %v1717
          %1782 = vst [vmem:[%s271 + $0xa4] sm:$0xf] %v1718
          %1783 = vst [vmem:[%s271 + $0xa8] sm:$0xf] %v1719
          %1784 = vst [vmem:[%s271 + $0xac] sm:$0xf] %v1720
          %1785 = vst [vmem:[%s271 + $0xb0] sm:$0xf] %v1721
          %1786 = vst [vmem:[%s271 + $0xb4] sm:$0xf] %v1722
          %1787 = vst [vmem:[%s271 + $0xb8] sm:$0xf] %v1723
          %1788 = vst [vmem:[%s271 + $0xbc] sm:$0xf] %v1724
          %1789 = vst [vmem:[%s271 + $0xc0] sm:$0xf] %v1725
          %1790 = vst [vmem:[%s271 + $0xc4] sm:$0xf] %v1726
          %1791 = vst [vmem:[%s271 + $0xc8] sm:$0xf] %v1727
          %1792 = vst [vmem:[%s271 + $0xcc] sm:$0xf] %v1728
          %1793 = vst [vmem:[%s271 + $0xd0] sm:$0xf] %v1729
          %1794 = vst [vmem:[%s271 + $0xd4] sm:$0xf] %v1730
          %1795 = vst [vmem:[%s271 + $0xd8] sm:$0xf] %v1731
          %1796 = vst [vmem:[%s271 + $0xdc] sm:$0xf] %v1732
          %1797 = vst [vmem:[%s271 + $0xe0] sm:$0xf] %v1733
          %1798 = vst [vmem:[%s271 + $0xe4] sm:$0xf] %v1734
          %1799 = vst [vmem:[%s271 + $0xe8] sm:$0xf] %v1735
          %1800 = vst [vmem:[%s271 + $0xec] sm:$0xf] %v1736
          %1801 = vst [vmem:[%s271 + $0xf0] sm:$0xf] %v1737
          %1802 = vst [vmem:[%s271 + $0xf4] sm:$0xf] %v1738
          %1803 = vst [vmem:[%s271 + $0xf8] sm:$0xf] %v1739
          %1804 = vst [vmem:[%s271 + $0xfc] sm:$0xf] %v1740
        $region44: #{_conv2d_impl.1} parent=35 // pred_fallthru
          _
        %s1805 = sand.u32 %s155, 1
        %s1806 = scalar_lea.sflag [#allocation4], %s1805
        %s1807 = sand.u32 %s155, 1
        %s1808 = smul.addr %s1807, 256
        %s1809 = scalar_lea.vmem [#allocation3], %s1808
        // Predicated region
        $region45: #{_conv2d_impl.1} parent=35 // pred_check
          %p1810 = pneg %p165
        $region46: #{_conv2d_impl.1} parent=35 // pred_check_branch
          %1812 = sbr.rel (%p1810) target = $region48
        $region47: #{_conv2d_impl.1} parent=35 // pred_region
          %s1813 = smul.u32 64, %s23
          %1815 = vsyncadd %s1806, 0
          %s1816 = sadd.s32 %s24, %s1813
          %s1817 = smul.addr %s1816, 4
          %s1818 = scalar_lea.hbm %s4, %s1817
          %s1819 = sshll.u32 %s1809, 4
          %s1820 = int_to_ptr.vmem [resolvable:$true] %s1819
          %s1821 = sshll.u32 %s1818, 4
          %s1822 = int_to_ptr.hbm [resolvable:$true] %s1821
          %1827 = dma.vmem_to_hbm [thread:$0]  %s1820, 4096, %s1822, %s1806, 64, 64, 4
        $region48: #{_conv2d_impl.1} parent=35 // pred_fallthru
          _
      $region36: #{_conv2d_impl.1} parent=5 // pred_fallthru
        _
      %p1828 = scmp.le.s32.totalorder 2, %s13
      // Predicated region
      $region49: #{_conv2d_impl.1} parent=5 // pred_check
        %p1829 = pneg %p1828
      $region50: #{_conv2d_impl.1} parent=5 // pred_check_branch
        %1831 = sbr.rel (%p1829) target = $region52
      $region51: #{_conv2d_impl.1} parent=5 // pred_region
        %s1832 = ssub.s32 %s13, 2
        // Predicated region
        $region53: #{_conv2d_impl.1} parent=51 // pred_check
          %p1833 = pneg %p171
        $region54: #{_conv2d_impl.1} parent=51 // pred_check_branch
          %1835 = sbr.rel (%p1833) target = $region56
        $region55: #{_conv2d_impl.1} parent=51 // pred_region
          %s1836 = sand.u32 %s156, 1
          %s1837 = scalar_lea.sflag [#allocation4], %s1836
          %s1838 = sand.u32 %s156, 1
          %s1839 = smul.addr %s1838, 256
          %s1840 = scalar_lea.vmem [#allocation3], %s1839
          %1842 = dma.done %s1837, 4096
        $region56: #{_conv2d_impl.1} parent=51 // pred_fallthru
          _
      $region52: #{_conv2d_impl.1} parent=5 // pred_fallthru
        _
    $region6: #{_conv2d_impl.1} parent=1 // loop_footer
      %s17 = sadd.s32 1, %s13
    $region7: #{_conv2d_impl.1} parent=1 // loop_footer_branch
      %12 = sbr.rel target = $region3
    $region8: #{_conv2d_impl.1} parent=1 // loop_exit
      _
    %1843 = vsyncpa [#allocation4], 1
    %s1844 = scalar_lea.sflag [#allocation4], 1
    %1845 = vsyncpa %s1844, 1

</llo_original>
